<compile_context>
chip_gen: v6e
topology: v6e:2x2x1
jax: 0.10.0
libtpu: 0.0.40
codegen_flags: <defaults>
</compile_context>

<pallas_src>
import functools
import math

import numpy as np
import jax
import jax.numpy as jnp
from jax.experimental import pallas as pl
from jax.experimental.pallas import tpu as pltpu


_DEFAULT_BLOCK_N = 8192            # coordinates (lanes) per grid step
_VMEM_LIMIT_BYTES = 48 * 1024 * 1024   # < 64 MiB physical on v7x, ample elsewhere
_IN_PAD = 8                        # cell-1 input rows padded to one sublane tile


def _round_up(x, m):
    return (x + m - 1) // m * m


def _padded_n(n, block_n):
    n128 = _round_up(max(int(n), 1), 128)
    bn = min(_round_up(block_n, 128), n128)
    return _round_up(n128, bn)


def _choose_block(n_pad, block_n):
    """Pick a block size that divides n_pad exactly (no dropped tiles)."""
    bn = min(_round_up(block_n, 128), n_pad)
    if n_pad % bn:
        bn = math.gcd(n_pad, bn)           # both multiples of 128
    # Prefer >=2 grid steps so ("parallel",) can split across v7x's 2 TCs.
    if bn == n_pad and n_pad >= 256 and (n_pad // 2) % 128 == 0:
        bn = n_pad // 2
    assert n_pad % bn == 0
    return bn


# --------------------------------------------------------------------------
# Pallas kernel.  PyTorch gate order (i, f, g, o);
#   c' = sigmoid(f)*c + sigmoid(i)*tanh(g);  h' = sigmoid(o)*tanh(c').
# Layout: everything is [features (sublanes), coordinates (lanes)].
# --------------------------------------------------------------------------
def _optimizer_kernel(grads_ref, h0_ref, c0_ref, h1_ref, c1_ref,
                      w1x_ref, w1h_ref, w2a_ref, w2b_ref, b2_ref,
                      wout_ref, bout_ref,
                      out_ref, h0o_ref, h1o_ref, c0o_ref, c1o_ref,
                      *, hp, in_pad, preproc, preproc_factor):
    nb = grads_ref.shape[-1]
    f32 = jnp.float32

    g = grads_ref[...].astype(f32)                       # (1, nb) lane-dense grads
    if preproc:
        # Fused gradient preprocessing (VPU/EUP work, rides for free).
        absg = jnp.abs(g)
        keep = absg >= float(np.exp(-preproc_factor))
        sign = jnp.where(g > 0.0, 1.0, jnp.where(g < 0.0, -1.0, 0.0))
        col0 = jnp.where(keep, jnp.log(absg + 1e-8) * (1.0 / preproc_factor), -1.0)
        col1 = jnp.where(keep, sign, float(np.exp(preproc_factor)) * g)
        x = jnp.concatenate([col0, col1], axis=0)        # (2, nb)
    else:
        x = g                                            # (1, nb)
    in_rows = x.shape[0]

    # Pad input to a full sublane tile; the LAST pad row is the constant-1 bias
    # carrier (b_ih1 + b_hh1 folded into column in_pad-1 of w1x at pack time).
    pieces = [x]
    n_zero = in_pad - in_rows - 1
    if n_zero > 0:
        pieces.append(jnp.zeros((n_zero, nb), f32))
    pieces.append(jnp.ones((1, nb), f32))
    x_aug = jnp.concatenate(pieces, axis=0)              # (in_pad, nb)

    def gates_to_hc(gates, c):
        i_g = jax.nn.sigmoid(gates[0 * hp:1 * hp, :])
        f_g = jax.nn.sigmoid(gates[1 * hp:2 * hp, :])
        g_g = jnp.tanh(gates[2 * hp:3 * hp, :])
        o_g = jax.nn.sigmoid(gates[3 * hp:4 * hp, :])
        c_new = f_g * c + i_g * g_g
        h_new = o_g * jnp.tanh(c_new)
        return h_new, c_new

    # Cell 1: gates = W1x @ [x ; 0 ; 1] + W1h @ h0     (bias folded into W1x)
    h0f = h0_ref[...].astype(f32)
    gates1 = (jnp.dot(w1x_ref[...], x_aug, preferred_element_type=f32)
              + jnp.dot(w1h_ref[...], h0f, preferred_element_type=f32))
    h0n, c0n = gates_to_hc(gates1, c0_ref[...])

    # Cell 2: two dots, no (2*HP, nb) concat buffer.
    h1f = h1_ref[...].astype(f32)
    gates2 = (jnp.dot(w2a_ref[...], h0n, preferred_element_type=f32)
              + jnp.dot(w2b_ref[...], h1f, preferred_element_type=f32)
              + b2_ref[...])
    h1n, c1n = gates_to_hc(gates2, c1_ref[...])

    # Output Linear(H->1): VPU multiply + sublane reduce -> lane-dense (1, nb).
    out_ref[...] = jnp.sum(h1n * wout_ref[...], axis=0, keepdims=True) + bout_ref[...]
    h0o_ref[...] = h0n.astype(h0o_ref.dtype)
    h1o_ref[...] = h1n.astype(h1o_ref.dtype)
    c0o_ref[...] = c0n
    c1o_ref[...] = c1n


# --------------------------------------------------------------------------
# Parameter construction (deterministic, PyTorch-style uniform init).
# --------------------------------------------------------------------------
def init_optimizer_params(key, hidden_sz=20, preproc=False):
    in_sz = 2 if preproc else 1
    bound = 1.0 / np.sqrt(hidden_sz)
    keys = jax.random.split(key, 11)

    def u(k, shape):
        return jax.random.uniform(k, shape, jnp.float32, -bound, bound)

    return {
        "w_ih1": u(keys[0], (4 * hidden_sz, in_sz)),
        "w_hh1": u(keys[1], (4 * hidden_sz, hidden_sz)),
        "b_ih1": u(keys[2], (4 * hidden_sz,)),
        "b_hh1": u(keys[3], (4 * hidden_sz,)),
        "w_ih2": u(keys[4], (4 * hidden_sz, hidden_sz)),
        "w_hh2": u(keys[5], (4 * hidden_sz, hidden_sz)),
        "b_ih2": u(keys[6], (4 * hidden_sz,)),
        "b_hh2": u(keys[7], (4 * hidden_sz,)),
        "w_out": u(keys[8], (1, hidden_sz)),
        "b_out": u(keys[9], (1,)),
    }


# --------------------------------------------------------------------------
# One-time packing: transpose, gate-pad (H -> HP = round_up(H, 8)), fold the
# cell-1 biases into a constant-1 input row.  Runs OUTSIDE the step jit.
# --------------------------------------------------------------------------
def pack_optimizer_params(params, hidden_sz=20, preproc=False):
    H = hidden_sz
    HP = _round_up(H, 8)
    GP = 4 * HP
    in_sz = 2 if preproc else 1
    IP = _IN_PAD

    def expand_rows(w4h):                    # (4H, K) -> (GP, K), per-gate row pad
        K = w4h.shape[1]
        out = jnp.zeros((GP, K), jnp.float32)
        for g in range(4):
            out = out.at[g * HP:g * HP + H, :].set(w4h[g * H:(g + 1) * H, :])
        return out

    def expand_cols(w, kp):                  # (GP, K) -> (GP, kp) zero col pad
        return jnp.zeros((GP, kp), jnp.float32).at[:, :w.shape[1]].set(w)

    b1 = expand_rows((params["b_ih1"] + params["b_hh1"])[:, None])   # (GP, 1)
    w1x = jnp.zeros((GP, IP), jnp.float32)
    w1x = w1x.at[:, :in_sz].set(expand_rows(params["w_ih1"]))
    w1x = w1x.at[:, IP - 1:IP].set(b1)       # bias folded into the ones row
    w1h = expand_cols(expand_rows(params["w_hh1"]), HP)

    w2a = expand_cols(expand_rows(params["w_ih2"]), HP)
    w2b = expand_cols(expand_rows(params["w_hh2"]), HP)
    b2 = expand_rows((params["b_ih2"] + params["b_hh2"])[:, None])

    wout = jnp.zeros((HP, 1), jnp.float32).at[:H, 0].set(params["w_out"][0, :])
    bout = params["b_out"].reshape(1, 1).astype(jnp.float32)

    return {"w1x": w1x, "w1h": w1h, "w2a": w2a, "w2b": w2b,
            "b2": b2, "wout": wout, "bout": bout}


# --------------------------------------------------------------------------
# One-time conversion of natural-layout (N, H) state into kernel layout
# (HP, N_pad); h-state stored in h_dtype (bf16 by default), c-state f32.
# --------------------------------------------------------------------------
def prepare_state(hidden_nh, cell_nh, block_n=_DEFAULT_BLOCK_N,
                  h_dtype=jnp.bfloat16):
    h0, h1 = hidden_nh
    c0, c1 = cell_nh
    n, hdim = h0.shape
    hp = _round_up(hdim, 8)
    n_pad = _padded_n(n, block_n)

    def t(a, dt):
        return jnp.zeros((hp, n_pad), dt).at[:hdim, :n].set(a.T.astype(dt))

    return ((t(h0, h_dtype), t(h1, h_dtype)),
            (t(c0, jnp.float32), t(c1, jnp.float32)))


def prepare_grads(grads, n_pad):
    """(N,1) or (N,) grads -> lane-dense (1, N_pad).  The grad producer should
    fuse this into its own step so no extra relayout op runs per step."""
    g = jnp.asarray(grads, jnp.float32).reshape(-1)
    return jnp.zeros((1, n_pad), jnp.float32).at[0, :g.shape[0]].set(g)


def _make_call(n_pad, block_n, hp, in_pad, preproc, preproc_factor, h_dtype):
    grid = (n_pad // block_n,)
    state_spec = pl.BlockSpec((hp, block_n), lambda i: (0, i))
    row_spec = pl.BlockSpec((1, block_n), lambda i: (0, i))
    const = lambda i: (0, 0)      # weights stay VMEM-resident across grid steps

    kernel = functools.partial(_optimizer_kernel, hp=hp, in_pad=in_pad,
                               preproc=preproc, preproc_factor=preproc_factor)
    return pl.pallas_call(
        kernel,
        grid=grid,
        in_specs=[
            row_spec,                                      # grads (1, N_pad)
            state_spec, state_spec, state_spec, state_spec,  # h0, c0, h1, c1
            pl.BlockSpec((4 * hp, in_pad), const),         # w1x (bias folded)
            pl.BlockSpec((4 * hp, hp), const),             # w1h
            pl.BlockSpec((4 * hp, hp), const),             # w2a
            pl.BlockSpec((4 * hp, hp), const),             # w2b
            pl.BlockSpec((4 * hp, 1), const),              # b2
            pl.BlockSpec((hp, 1), const),                  # wout
            pl.BlockSpec((1, 1), const),                   # bout
        ],
        out_specs=(
            row_spec,                                      # update (1, N_pad)
            state_spec, state_spec, state_spec, state_spec,  # h0', h1', c0', c1'
        ),
        out_shape=(
            jax.ShapeDtypeStruct((1, n_pad), jnp.float32),
            jax.ShapeDtypeStruct((hp, n_pad), h_dtype),
            jax.ShapeDtypeStruct((hp, n_pad), h_dtype),
            jax.ShapeDtypeStruct((hp, n_pad), jnp.float32),
            jax.ShapeDtypeStruct((hp, n_pad), jnp.float32),
        ),
        # in-place state update: h0->h0', c0->c0', h1->h1', c1->c1'
        input_output_aliases={1: 1, 2: 3, 3: 2, 4: 4},
        compiler_params=pltpu.CompilerParams(
            dimension_semantics=("parallel",),
            vmem_limit_bytes=_VMEM_LIMIT_BYTES),
    )


# --------------------------------------------------------------------------
# Forward step.
#   grads_row : (1, N_pad) f32 lane-dense grads (see prepare_grads)
#   hidden/cell: tuples of (HP, N_pad) kernel-layout state (prepare_state or
#                a previous optimizer_forward call)
# Returns: (update (1, N_pad), (h0', h1'), (c0', c1')) in kernel layout.
# --------------------------------------------------------------------------
@functools.partial(jax.jit, static_argnames=("preproc", "preproc_factor", "block_n"))
def optimizer_forward(packed, grads_row, hidden, cell, *, preproc=False,
                      preproc_factor=10.0, block_n=_DEFAULT_BLOCK_N):
    h0, h1 = hidden
    c0, c1 = cell
    hp, n_pad = h0.shape
    assert grads_row.shape == (1, n_pad), \
        "grads must be lane-dense (1, N_pad); use prepare_grads()"
    bn = _choose_block(n_pad, block_n)
    call = _make_call(n_pad, bn, hp, _IN_PAD, preproc, float(preproc_factor),
                      h0.dtype)
    out_t, h0n, h1n, c0n, c1n = call(
        grads_row, h0, c0, h1, c1,
        packed["w1x"], packed["w1h"], packed["w2a"], packed["w2b"],
        packed["b2"], packed["wout"], packed["bout"])
    return out_t, (h0n, h1n), (c0n, c1n)


# --------------------------------------------------------------------------
# Pure-JAX reference (natural layout) for sanity checking.
# --------------------------------------------------------------------------
def preprocess_reference(inp, preproc_factor=10.0):
    thresh = np.exp(-preproc_factor)
    g = inp[:, 0]
    keep = jnp.abs(g) >= thresh
    sign = jnp.where(g > 0.0, 1.0, jnp.where(g < 0.0, -1.0, 0.0))
    col0 = jnp.where(keep, jnp.log(jnp.abs(g) + 1e-8) / preproc_factor, -1.0)
    col1 = jnp.where(keep, sign, float(np.exp(preproc_factor)) * g)
    return jnp.stack([col0, col1], axis=1)


def reference_forward(params, inp, hidden, cell):
    def lstm_cell(x, h, c, w_ih, w_hh, b_ih, b_hh):
        gates = x @ w_ih.T + b_ih + h @ w_hh.T + b_hh
        H = h.shape[-1]
        i, f, g, o = (gates[:, :H], gates[:, H:2 * H],
                      gates[:, 2 * H:3 * H], gates[:, 3 * H:])
        c_new = jax.nn.sigmoid(f) * c + jax.nn.sigmoid(i) * jnp.tanh(g)
        h_new = jax.nn.sigmoid(o) * jnp.tanh(c_new)
        return h_new, c_new

    h0, c0 = lstm_cell(inp, hidden[0], cell[0],
                       params["w_ih1"], params["w_hh1"],
                       params["b_ih1"], params["b_hh1"])
    h1, c1 = lstm_cell(h0, hidden[1], cell[1],
                       params["w_ih2"], params["w_hh2"],
                       params["b_ih2"], params["b_hh2"])
    out = h1 @ params["w_out"].T + params["b_out"]
    return out, (h0, h1), (c0, c1)


def _state_to_nh(x_t, n, h):
    return np.asarray(x_t[:h, :n].astype(jnp.float32).T)


if __name__ == "__main__":
    HIDDEN = 20   # module default hidden_sz=20
    N = 37        # number of coordinates (exercises lane padding)
    STRICT = dict(rtol=5e-5, atol=5e-5)
    LOOSE = dict(rtol=2e-2, atol=2e-2)   # bf16 h-state storage

    key = jax.random.PRNGKey(0)
    ks = jax.random.split(key, 8)

    params = init_optimizer_params(ks[0], hidden_sz=HIDDEN, preproc=False)
    packed = pack_optimizer_params(params, hidden_sz=HIDDEN, preproc=False)

    grads1 = jax.random.normal(ks[1], (N, 1), jnp.float32) * 0.1
    grads2 = jax.random.normal(ks[2], (N, 1), jnp.float32) * 0.1
    hidden_nh = (jax.random.normal(ks[3], (N, HIDDEN), jnp.float32) * 0.1,
                 jax.random.normal(ks[4], (N, HIDDEN), jnp.float32) * 0.1)
    cell_nh = (jax.random.normal(ks[5], (N, HIDDEN), jnp.float32) * 0.1,
               jax.random.normal(ks[6], (N, HIDDEN), jnp.float32) * 0.1)

    r1_out, r1_h, r1_c = reference_forward(params, grads1, hidden_nh, cell_nh)
    r2_out, r2_h, r2_c = reference_forward(params, grads2, r1_h, r1_c)

    # ---------- strict f32 check (no preproc), two chained steps ----------
    hs0, cs0 = prepare_state(hidden_nh, cell_nh, h_dtype=jnp.float32)
    n_pad = hs0[0].shape[1]
    g1 = prepare_grads(grads1, n_pad)
    g2 = prepare_grads(grads2, n_pad)

    out1_t, hs1, cs1 = optimizer_forward(packed, g1, hs0, cs0, preproc=False)
    out2_t, hs2, cs2 = optimizer_forward(packed, g2, hs1, cs1, preproc=False)
    jax.block_until_ready((out1_t, out2_t, hs2, cs2))

    np.testing.assert_allclose(np.asarray(out1_t[0, :N])[:, None],
                               np.asarray(r1_out), **STRICT)
    np.testing.assert_allclose(np.asarray(out2_t[0, :N])[:, None],
                               np.asarray(r2_out), **STRICT)
    for kern_s, ref_s in ((hs1, r1_h), (cs1, r1_c), (hs2, r2_h), (cs2, r2_c)):
        for k_arr, r_arr in zip(kern_s, ref_s):
            np.testing.assert_allclose(_state_to_nh(k_arr, N, HIDDEN),
                                       np.asarray(r_arr), **STRICT)

    # ---------- default config: bf16 h-state storage, f32 c-state ----------
    hb0, cb0 = prepare_state(hidden_nh, cell_nh)          # h_dtype=bf16 default
    outb1_t, hb1, cb1 = optimizer_forward(packed, g1, hb0, cb0, preproc=False)
    outb2_t, hb2, cb2 = optimizer_forward(packed, g2, hb1, cb1, preproc=False)
    jax.block_until_ready((outb1_t, outb2_t, hb2, cb2))

    np.testing.assert_allclose(np.asarray(outb1_t[0, :N])[:, None],
                               np.asarray(r1_out), **LOOSE)
    np.testing.assert_allclose(np.asarray(outb2_t[0, :N])[:, None],
                               np.asarray(r2_out), **LOOSE)
    for kern_s, ref_s in ((hb2, r2_h), (cb2, r2_c)):
        for k_arr, r_arr in zip(kern_s, ref_s):
            np.testing.assert_allclose(_state_to_nh(k_arr, N, HIDDEN),
                                       np.asarray(r_arr), **LOOSE)

    # ---------- model WITH in-kernel gradient preprocessing (strict f32) ----------
    params_p = init_optimizer_params(ks[7], hidden_sz=HIDDEN, preproc=True)
    packed_p = pack_optimizer_params(params_p, hidden_sz=HIDDEN, preproc=True)

    hsp, csp = prepare_state(hidden_nh, cell_nh, h_dtype=jnp.float32)
    outp_t, hsp1, csp1 = optimizer_forward(packed_p, g1, hsp, csp, preproc=True)
    jax.block_until_ready((outp_t, hsp1, csp1))

    inp_pre = preprocess_reference(grads1)
    rp_out, rp_h, rp_c = reference_forward(params_p, inp_pre, hidden_nh, cell_nh)

    np.testing.assert_allclose(np.asarray(outp_t[0, :N])[:, None],
                               np.asarray(rp_out), **STRICT)
    for kern_s, ref_s in ((hsp1, rp_h), (csp1, rp_c)):
        for k_arr, r_arr in zip(kern_s, ref_s):
            np.testing.assert_allclose(_state_to_nh(k_arr, N, HIDDEN),
                                       np.asarray(r_arr), **STRICT)

    print("KERNEL_OK")
</pallas_src>

<mosaic_0001>
module attributes {stable_mosaic.version = 11 : i64} {
  func.func @_optimizer_kernel(%arg0: i32, %arg1: memref<1x128xf32, #tpu.memory_space<vmem>>, %arg2: memref<24x128xf32, #tpu.memory_space<vmem>>, %arg3: memref<24x128xf32, #tpu.memory_space<vmem>>, %arg4: memref<24x128xf32, #tpu.memory_space<vmem>>, %arg5: memref<24x128xf32, #tpu.memory_space<vmem>>, %arg6: memref<96x8xf32, #tpu.memory_space<vmem>>, %arg7: memref<96x24xf32, #tpu.memory_space<vmem>>, %arg8: memref<96x24xf32, #tpu.memory_space<vmem>>, %arg9: memref<96x24xf32, #tpu.memory_space<vmem>>, %arg10: memref<96x1xf32, #tpu.memory_space<vmem>>, %arg11: memref<24x1xf32, #tpu.memory_space<vmem>>, %arg12: memref<1x1xf32, #tpu.memory_space<vmem>>, %arg13: memref<1x128xf32, #tpu.memory_space<vmem>>, %arg14: memref<24x128xf32, #tpu.memory_space<vmem>>, %arg15: memref<24x128xf32, #tpu.memory_space<vmem>>, %arg16: memref<24x128xf32, #tpu.memory_space<vmem>>, %arg17: memref<24x128xf32, #tpu.memory_space<vmem>>) attributes {dimension_semantics = [#tpu.dimension_semantics<parallel>], iteration_bounds = array<i64: 1>, scalar_prefetch = 0 : i64, scratch_operands = 0 : i64, tpu.core_type = #tpu.core_type<tc>, window_params = [{transform_indices = @transform_0, window_bounds = array<i64: 1, 128>}, {transform_indices = @transform_1, window_bounds = array<i64: 24, 128>}, {transform_indices = @transform_2, window_bounds = array<i64: 24, 128>}, {transform_indices = @transform_3, window_bounds = array<i64: 24, 128>}, {transform_indices = @transform_4, window_bounds = array<i64: 24, 128>}, {pipeline_mode = #tpu.pipeline_mode<synchronous>, transform_indices = @transform_5, window_bounds = array<i64: 96, 8>}, {pipeline_mode = #tpu.pipeline_mode<synchronous>, transform_indices = @transform_6, window_bounds = array<i64: 96, 24>}, {pipeline_mode = #tpu.pipeline_mode<synchronous>, transform_indices = @transform_7, window_bounds = array<i64: 96, 24>}, {pipeline_mode = #tpu.pipeline_mode<synchronous>, transform_indices = @transform_8, window_bounds = array<i64: 96, 24>}, {pipeline_mode = #tpu.pipeline_mode<synchronous>, transform_indices = @transform_9, window_bounds = array<i64: 96, 1>}, {pipeline_mode = #tpu.pipeline_mode<synchronous>, transform_indices = @transform_10, window_bounds = array<i64: 24, 1>}, {pipeline_mode = #tpu.pipeline_mode<synchronous>, transform_indices = @transform_11, window_bounds = array<i64: 1, 1>}, {transform_indices = @transform_12, window_bounds = array<i64: 1, 128>}, {transform_indices = @transform_13, window_bounds = array<i64: 24, 128>}, {transform_indices = @transform_14, window_bounds = array<i64: 24, 128>}, {transform_indices = @transform_15, window_bounds = array<i64: 24, 128>}, {transform_indices = @transform_16, window_bounds = array<i64: 24, 128>}]} {
    %c0 = arith.constant 0 : index
    %c0_0 = arith.constant 0 : index
    %0 = vector.load %arg1[%c0, %c0_0] : memref<1x128xf32, #tpu.memory_space<vmem>>, vector<1x128xf32>
    %cst = arith.constant 0.000000e+00 : f32
    %1 = vector.broadcast %cst : f32 to vector<6x128xf32>
    %cst_1 = arith.constant 1.000000e+00 : f32
    %2 = vector.broadcast %cst_1 : f32 to vector<1x128xf32>
    %3 = tpu.concatenate %0, %1, %2 in 0 : vector<1x128xf32>, vector<6x128xf32>, vector<1x128xf32> -> vector<8x128xf32>
    %c0_2 = arith.constant 0 : index
    %c0_3 = arith.constant 0 : index
    %4 = vector.load %arg2[%c0_2, %c0_3] : memref<24x128xf32, #tpu.memory_space<vmem>>, vector<24x128xf32>
    %c0_4 = arith.constant 0 : index
    %c0_5 = arith.constant 0 : index
    %5 = vector.load %arg6[%c0_4, %c0_5] : memref<96x8xf32, #tpu.memory_space<vmem>>, vector<96x8xf32>
    %cst_6 = arith.constant dense<0.000000e+00> : vector<96x128xf32>
    %6 = tpu.matmul %5, %3, %cst_6 {dimension_numbers = #tpu.dot_dimension_numbers<[1], [0], [0], [1], [0, 0, 1, 1], [], []>} : vector<96x8xf32>, vector<8x128xf32>, vector<96x128xf32> -> vector<96x128xf32>
    %c0_7 = arith.constant 0 : index
    %c0_8 = arith.constant 0 : index
    %7 = vector.load %arg7[%c0_7, %c0_8] : memref<96x24xf32, #tpu.memory_space<vmem>>, vector<96x24xf32>
    %cst_9 = arith.constant dense<0.000000e+00> : vector<96x128xf32>
    %8 = tpu.matmul %7, %4, %cst_9 {dimension_numbers = #tpu.dot_dimension_numbers<[1], [0], [0], [1], [0, 0, 1, 1], [], []>} : vector<96x24xf32>, vector<24x128xf32>, vector<96x128xf32> -> vector<96x128xf32>
    %9 = arith.addf %6, %8 : vector<96x128xf32>
    %c0_10 = arith.constant 0 : index
    %c0_11 = arith.constant 0 : index
    %10 = vector.load %arg3[%c0_10, %c0_11] : memref<24x128xf32, #tpu.memory_space<vmem>>, vector<24x128xf32>
    %11 = vector.extract_strided_slice %9 {offsets = [0, 0], sizes = [24, 128], strides = [1, 1]} : vector<96x128xf32> to vector<24x128xf32>
    %12 = arith.negf %11 : vector<24x128xf32>
    %13 = math.exp %12 : vector<24x128xf32>
    %cst_12 = arith.constant 1.000000e+00 : f32
    %14 = vector.broadcast %cst_12 : f32 to vector<24x128xf32>
    %15 = arith.addf %14, %13 : vector<24x128xf32>
    %16 = arith.divf %14, %15 : vector<24x128xf32>
    %17 = vector.extract_strided_slice %9 {offsets = [24, 0], sizes = [24, 128], strides = [1, 1]} : vector<96x128xf32> to vector<24x128xf32>
    %18 = arith.negf %17 : vector<24x128xf32>
    %19 = math.exp %18 : vector<24x128xf32>
    %cst_13 = arith.constant 1.000000e+00 : f32
    %20 = vector.broadcast %cst_13 : f32 to vector<24x128xf32>
    %21 = arith.addf %20, %19 : vector<24x128xf32>
    %22 = arith.divf %20, %21 : vector<24x128xf32>
    %23 = vector.extract_strided_slice %9 {offsets = [48, 0], sizes = [24, 128], strides = [1, 1]} : vector<96x128xf32> to vector<24x128xf32>
    %24 = math.tanh %23 : vector<24x128xf32>
    %25 = vector.extract_strided_slice %9 {offsets = [72, 0], sizes = [24, 128], strides = [1, 1]} : vector<96x128xf32> to vector<24x128xf32>
    %26 = arith.negf %25 : vector<24x128xf32>
    %27 = math.exp %26 : vector<24x128xf32>
    %cst_14 = arith.constant 1.000000e+00 : f32
    %28 = vector.broadcast %cst_14 : f32 to vector<24x128xf32>
    %29 = arith.addf %28, %27 : vector<24x128xf32>
    %30 = arith.divf %28, %29 : vector<24x128xf32>
    %31 = arith.mulf %22, %10 : vector<24x128xf32>
    %32 = arith.mulf %16, %24 : vector<24x128xf32>
    %33 = arith.addf %31, %32 : vector<24x128xf32>
    %34 = math.tanh %33 : vector<24x128xf32>
    %35 = arith.mulf %30, %34 : vector<24x128xf32>
    %c0_15 = arith.constant 0 : index
    %c0_16 = arith.constant 0 : index
    %36 = vector.load %arg4[%c0_15, %c0_16] : memref<24x128xf32, #tpu.memory_space<vmem>>, vector<24x128xf32>
    %c0_17 = arith.constant 0 : index
    %c0_18 = arith.constant 0 : index
    %37 = vector.load %arg8[%c0_17, %c0_18] : memref<96x24xf32, #tpu.memory_space<vmem>>, vector<96x24xf32>
    %cst_19 = arith.constant dense<0.000000e+00> : vector<96x128xf32>
    %38 = tpu.matmul %37, %35, %cst_19 {dimension_numbers = #tpu.dot_dimension_numbers<[1], [0], [0], [1], [0, 0, 1, 1], [], []>} : vector<96x24xf32>, vector<24x128xf32>, vector<96x128xf32> -> vector<96x128xf32>
    %c0_20 = arith.constant 0 : index
    %c0_21 = arith.constant 0 : index
    %39 = vector.load %arg9[%c0_20, %c0_21] : memref<96x24xf32, #tpu.memory_space<vmem>>, vector<96x24xf32>
    %cst_22 = arith.constant dense<0.000000e+00> : vector<96x128xf32>
    %40 = tpu.matmul %39, %36, %cst_22 {dimension_numbers = #tpu.dot_dimension_numbers<[1], [0], [0], [1], [0, 0, 1, 1], [], []>} : vector<96x24xf32>, vector<24x128xf32>, vector<96x128xf32> -> vector<96x128xf32>
    %41 = arith.addf %38, %40 : vector<96x128xf32>
    %c0_23 = arith.constant 0 : index
    %c0_24 = arith.constant 0 : index
    %42 = vector.load %arg10[%c0_23, %c0_24] : memref<96x1xf32, #tpu.memory_space<vmem>>, vector<96x1xf32>
    %43 = vector.broadcast %42 : vector<96x1xf32> to vector<96x128xf32>
    %44 = arith.addf %41, %43 : vector<96x128xf32>
    %c0_25 = arith.constant 0 : index
    %c0_26 = arith.constant 0 : index
    %45 = vector.load %arg5[%c0_25, %c0_26] : memref<24x128xf32, #tpu.memory_space<vmem>>, vector<24x128xf32>
    %46 = vector.extract_strided_slice %44 {offsets = [0, 0], sizes = [24, 128], strides = [1, 1]} : vector<96x128xf32> to vector<24x128xf32>
    %47 = arith.negf %46 : vector<24x128xf32>
    %48 = math.exp %47 : vector<24x128xf32>
    %cst_27 = arith.constant 1.000000e+00 : f32
    %49 = vector.broadcast %cst_27 : f32 to vector<24x128xf32>
    %50 = arith.addf %49, %48 : vector<24x128xf32>
    %51 = arith.divf %49, %50 : vector<24x128xf32>
    %52 = vector.extract_strided_slice %44 {offsets = [24, 0], sizes = [24, 128], strides = [1, 1]} : vector<96x128xf32> to vector<24x128xf32>
    %53 = arith.negf %52 : vector<24x128xf32>
    %54 = math.exp %53 : vector<24x128xf32>
    %cst_28 = arith.constant 1.000000e+00 : f32
    %55 = vector.broadcast %cst_28 : f32 to vector<24x128xf32>
    %56 = arith.addf %55, %54 : vector<24x128xf32>
    %57 = arith.divf %55, %56 : vector<24x128xf32>
    %58 = vector.extract_strided_slice %44 {offsets = [48, 0], sizes = [24, 128], strides = [1, 1]} : vector<96x128xf32> to vector<24x128xf32>
    %59 = math.tanh %58 : vector<24x128xf32>
    %60 = vector.extract_strided_slice %44 {offsets = [72, 0], sizes = [24, 128], strides = [1, 1]} : vector<96x128xf32> to vector<24x128xf32>
    %61 = arith.negf %60 : vector<24x128xf32>
    %62 = math.exp %61 : vector<24x128xf32>
    %cst_29 = arith.constant 1.000000e+00 : f32
    %63 = vector.broadcast %cst_29 : f32 to vector<24x128xf32>
    %64 = arith.addf %63, %62 : vector<24x128xf32>
    %65 = arith.divf %63, %64 : vector<24x128xf32>
    %66 = arith.mulf %57, %45 : vector<24x128xf32>
    %67 = arith.mulf %51, %59 : vector<24x128xf32>
    %68 = arith.addf %66, %67 : vector<24x128xf32>
    %69 = math.tanh %68 : vector<24x128xf32>
    %70 = arith.mulf %65, %69 : vector<24x128xf32>
    %c0_30 = arith.constant 0 : index
    %c0_31 = arith.constant 0 : index
    %71 = vector.load %arg11[%c0_30, %c0_31] : memref<24x1xf32, #tpu.memory_space<vmem>>, vector<24x1xf32>
    %72 = vector.broadcast %71 : vector<24x1xf32> to vector<24x128xf32>
    %73 = arith.mulf %70, %72 : vector<24x128xf32>
    %cst_32 = arith.constant dense<0.000000e+00> : vector<128xf32>
    %74 = vector.multi_reduction <add>, %73, %cst_32 [0] : vector<24x128xf32> to vector<128xf32>
    %75 = vector.shape_cast %74 : vector<128xf32> to vector<1x128xf32>
    %c0_33 = arith.constant 0 : index
    %c0_34 = arith.constant 0 : index
    %76 = vector.load %arg12[%c0_33, %c0_34] : memref<1x1xf32, #tpu.memory_space<vmem>>, vector<1x1xf32>
    %77 = vector.broadcast %76 : vector<1x1xf32> to vector<1x128xf32>
    %78 = arith.addf %75, %77 : vector<1x128xf32>
    %c0_35 = arith.constant 0 : index
    %c0_36 = arith.constant 0 : index
    %79 = vector.load %arg13[%c0_35, %c0_36] : memref<1x128xf32, #tpu.memory_space<vmem>>, vector<1x128xf32>
    tpu.vector_store %arg13[%c0_35, %c0_36], %78 {strides = array<i32>} : memref<1x128xf32, #tpu.memory_space<vmem>>, vector<1x128xf32>,
    %c0_37 = arith.constant 0 : index
    %c0_38 = arith.constant 0 : index
    %80 = vector.load %arg14[%c0_37, %c0_38] : memref<24x128xf32, #tpu.memory_space<vmem>>, vector<24x128xf32>
    tpu.vector_store %arg14[%c0_37, %c0_38], %35 {strides = array<i32>} : memref<24x128xf32, #tpu.memory_space<vmem>>, vector<24x128xf32>,
    %c0_39 = arith.constant 0 : index
    %c0_40 = arith.constant 0 : index
    %81 = vector.load %arg15[%c0_39, %c0_40] : memref<24x128xf32, #tpu.memory_space<vmem>>, vector<24x128xf32>
    tpu.vector_store %arg15[%c0_39, %c0_40], %70 {strides = array<i32>} : memref<24x128xf32, #tpu.memory_space<vmem>>, vector<24x128xf32>,
    %c0_41 = arith.constant 0 : index
    %c0_42 = arith.constant 0 : index
    %82 = vector.load %arg16[%c0_41, %c0_42] : memref<24x128xf32, #tpu.memory_space<vmem>>, vector<24x128xf32>
    tpu.vector_store %arg16[%c0_41, %c0_42], %33 {strides = array<i32>} : memref<24x128xf32, #tpu.memory_space<vmem>>, vector<24x128xf32>,
    %c0_43 = arith.constant 0 : index
    %c0_44 = arith.constant 0 : index
    %83 = vector.load %arg17[%c0_43, %c0_44] : memref<24x128xf32, #tpu.memory_space<vmem>>, vector<24x128xf32>
    tpu.vector_store %arg17[%c0_43, %c0_44], %68 {strides = array<i32>} : memref<24x128xf32, #tpu.memory_space<vmem>>, vector<24x128xf32>,
    return
  }
  func.func @transform_0(%arg0: i32) -> (i32, i32) {
    %c0_i32 = arith.constant 0 : i32
    %c0_i32_0 = arith.constant 0 : i32
    return %c0_i32, %arg0 : i32, i32
  }
  func.func @transform_1(%arg0: i32) -> (i32, i32) {
    %c0_i32 = arith.constant 0 : i32
    %c0_i32_0 = arith.constant 0 : i32
    return %c0_i32, %arg0 : i32, i32
  }
  func.func @transform_2(%arg0: i32) -> (i32, i32) {
    %c0_i32 = arith.constant 0 : i32
    %c0_i32_0 = arith.constant 0 : i32
    return %c0_i32, %arg0 : i32, i32
  }
  func.func @transform_3(%arg0: i32) -> (i32, i32) {
    %c0_i32 = arith.constant 0 : i32
    %c0_i32_0 = arith.constant 0 : i32
    return %c0_i32, %arg0 : i32, i32
  }
  func.func @transform_4(%arg0: i32) -> (i32, i32) {
    %c0_i32 = arith.constant 0 : i32
    %c0_i32_0 = arith.constant 0 : i32
    return %c0_i32, %arg0 : i32, i32
  }
  func.func @transform_5(%arg0: i32) -> (i32, i32) {
    %c0_i32 = arith.constant 0 : i32
    %c0_i32_0 = arith.constant 0 : i32
    %c0_i32_1 = arith.constant 0 : i32
    return %c0_i32, %c0_i32_0 : i32, i32
  }
  func.func @transform_6(%arg0: i32) -> (i32, i32) {
    %c0_i32 = arith.constant 0 : i32
    %c0_i32_0 = arith.constant 0 : i32
    %c0_i32_1 = arith.constant 0 : i32
    return %c0_i32, %c0_i32_0 : i32, i32
  }
  func.func @transform_7(%arg0: i32) -> (i32, i32) {
    %c0_i32 = arith.constant 0 : i32
    %c0_i32_0 = arith.constant 0 : i32
    %c0_i32_1 = arith.constant 0 : i32
    return %c0_i32, %c0_i32_0 : i32, i32
  }
  func.func @transform_8(%arg0: i32) -> (i32, i32) {
    %c0_i32 = arith.constant 0 : i32
    %c0_i32_0 = arith.constant 0 : i32
    %c0_i32_1 = arith.constant 0 : i32
    return %c0_i32, %c0_i32_0 : i32, i32
  }
  func.func @transform_9(%arg0: i32) -> (i32, i32) {
    %c0_i32 = arith.constant 0 : i32
    %c0_i32_0 = arith.constant 0 : i32
    %c0_i32_1 = arith.constant 0 : i32
    return %c0_i32, %c0_i32_0 : i32, i32
  }
  func.func @transform_10(%arg0: i32) -> (i32, i32) {
    %c0_i32 = arith.constant 0 : i32
    %c0_i32_0 = arith.constant 0 : i32
    %c0_i32_1 = arith.constant 0 : i32
    return %c0_i32, %c0_i32_0 : i32, i32
  }
  func.func @transform_11(%arg0: i32) -> (i32, i32) {
    %c0_i32 = arith.constant 0 : i32
    %c0_i32_0 = arith.constant 0 : i32
    %c0_i32_1 = arith.constant 0 : i32
    return %c0_i32, %c0_i32_0 : i32, i32
  }
  func.func @transform_12(%arg0: i32) -> (i32, i32) {
    %c0_i32 = arith.constant 0 : i32
    %c0_i32_0 = arith.constant 0 : i32
    return %c0_i32, %arg0 : i32, i32
  }
  func.func @transform_13(%arg0: i32) -> (i32, i32) {
    %c0_i32 = arith.constant 0 : i32
    %c0_i32_0 = arith.constant 0 : i32
    return %c0_i32, %arg0 : i32, i32
  }
  func.func @transform_14(%arg0: i32) -> (i32, i32) {
    %c0_i32 = arith.constant 0 : i32
    %c0_i32_0 = arith.constant 0 : i32
    return %c0_i32, %arg0 : i32, i32
  }
  func.func @transform_15(%arg0: i32) -> (i32, i32) {
    %c0_i32 = arith.constant 0 : i32
    %c0_i32_0 = arith.constant 0 : i32
    return %c0_i32, %arg0 : i32, i32
  }
  func.func @transform_16(%arg0: i32) -> (i32, i32) {
    %c0_i32 = arith.constant 0 : i32
    %c0_i32_0 = arith.constant 0 : i32
    return %c0_i32, %arg0 : i32, i32
  }
}

</mosaic_0001>

<llo_original>
// kernel: optimizer_forward.1
$region0: #{optimizer_forward.1}
  #allocation0 [shape = 'u32[]', space=smem, size = 0x4, offset = 0x4, fixed_abs, tag = 'smem constant byte address 0x4 - core index']
  #allocation1 [shape = 'u32[144,128]{1,0:T(1,128)}', space=vmem, size = 0x12000, scoped, tag = 'internal scratch']
  #allocation2 [shape = 'f32[1,1]{1,0:T(1,128)S(1)}', space=vmem, size = 0x200, scoped, tag = 'scoped memory for optimizer_forward.1']
  %s0 = inlined_call_operand.vmem [shape: f32[1,128], index: 0, kind: input, shape index: {}]
  %s1 = inlined_call_operand.hbm [shape: f32[24,128], index: 1, kind: input, shape index: {}, may-alias: {1,13}]
  %s2 = inlined_call_operand.hbm [shape: f32[24,128], index: 2, kind: input, shape index: {}, may-alias: {2,15}]
  %s3 = inlined_call_operand.hbm [shape: f32[24,128], index: 3, kind: input, shape index: {}, may-alias: {3,14}]
  %s4 = inlined_call_operand.hbm [shape: f32[24,128], index: 4, kind: input, shape index: {}, may-alias: {4,16}]
  %s5 = inlined_call_operand.vmem [shape: f32[96,8], index: 5, kind: input, shape index: {}]
  %s6 = inlined_call_operand.vmem [shape: f32[96,24], index: 6, kind: input, shape index: {}]
  %s7 = inlined_call_operand.vmem [shape: f32[96,24], index: 7, kind: input, shape index: {}]
  %s8 = inlined_call_operand.vmem [shape: f32[96,24], index: 8, kind: input, shape index: {}]
  %s9 = inlined_call_operand.vmem [shape: f32[96,1], index: 9, kind: input, shape index: {}]
  %s10 = inlined_call_operand.vmem [shape: f32[24,1], index: 10, kind: input, shape index: {}]
  %s11 = inlined_call_operand.<no memory space> [shape: f32[1,1], index: 11, kind: input, shape index: {}]
  %s12 = inlined_call_operand.hbm [shape: f32[1,128], index: 12, kind: output, shape index: {0}]
  %s13 = inlined_call_operand.hbm [shape: f32[24,128], index: 13, kind: output, shape index: {1}, may-alias: {1,13}]
  %s14 = inlined_call_operand.hbm [shape: f32[24,128], index: 14, kind: output, shape index: {2}, may-alias: {3,14}]
  %s15 = inlined_call_operand.hbm [shape: f32[24,128], index: 15, kind: output, shape index: {3}, may-alias: {2,15}]
  %s16 = inlined_call_operand.hbm [shape: f32[24,128], index: 16, kind: output, shape index: {4}, may-alias: {4,16}]
  %17 = xla_tuple %s12, %s13, %s14, %s15, %s16
  %s18 = sld [smem:[#allocation0]]
  $region106: #{optimizer_forward.1} parent=0
    _
  %s20 = ssub.s32 1, %s18
  %s21 = scalar_select 0, %s20, %s18
  %v22 = vstv %s11
  %23 = vst [vmem:[#allocation2] sm:$0x1] %v22
  $region1: #{optimizer_forward.1} parent=0
    #allocation3 [shape = 'u8[12288]{0}', space=vmem, size = 0x3000, scoped, tag = 'input window, operand 1, single buffered']
    #allocation4 [shape = 's32[1]{0}', space=sflag, size = 0x4, scoped, tag = 'scoped memory for optimizer_forward.1']
    #allocation5 [shape = 's32[1]{0}', space=sflag, size = 0x4, scoped, tag = 'scoped memory for optimizer_forward.1']
    #allocation6 [shape = 'u8[12288]{0}', space=vmem, size = 0x3000, scoped, tag = 'input window, operand 2, single buffered']
    #allocation7 [shape = 's32[1]{0}', space=sflag, size = 0x4, scoped, tag = 'scoped memory for optimizer_forward.1']
    #allocation8 [shape = 'u8[12288]{0}', space=vmem, size = 0x3000, scoped, tag = 'input window, operand 3, single buffered']
    #allocation9 [shape = 'u8[12288]{0}', space=vmem, size = 0x3000, scoped, tag = 'input window, operand 4, single buffered']
    #allocation10 [shape = 's32[1]{0}', space=sflag, size = 0x4, scoped, tag = 'scoped memory for optimizer_forward.1']
    #allocation11 [shape = 'u8[512]{0}', space=vmem, size = 0x400, scoped, tag = 'output window, operand 0, single buffered']
    #allocation12 [shape = 'u8[12288]{0}', space=vmem, size = 0x3000, scoped, tag = 'output window, operand 1, single buffered']
    #allocation13 [shape = 's32[1]{0}', space=sflag, size = 0x4, scoped, tag = 'scoped memory for optimizer_forward.1']
    #allocation14 [shape = 'u8[12288]{0}', space=vmem, size = 0x3000, scoped, tag = 'output window, operand 2, single buffered']
    #allocation15 [shape = 'u8[12288]{0}', space=vmem, size = 0x3000, scoped, tag = 'output window, operand 3, single buffered']
    #allocation16 [shape = 's32[1]{0}', space=sflag, size = 0x4, scoped, tag = 'scoped memory for optimizer_forward.1']
    #allocation17 [shape = 'u8[12288]{0}', space=vmem, size = 0x3000, scoped, tag = 'output window, operand 4, single buffered']
    %24 = vsyncpa [#allocation4], 0
    %25 = vsyncpa [#allocation7], 0
    %26 = vsyncpa [#allocation10], 0
    %27 = vsyncpa [#allocation5], 0
    %28 = vsyncpa [#allocation13], 0
    %29 = vsyncpa [#allocation16], 0
    // Predicated region
    $region2: #{optimizer_forward.1} parent=1 // pred_check
      _
    $region3: #{optimizer_forward.1} parent=1 // pred_check_branch
      %31 = sbr.rel (0) target = $region5
    $region4: #{optimizer_forward.1} parent=1 // pred_region
      _
    $region5: #{optimizer_forward.1} parent=1 // pred_fallthru
      _
    // Predicated region
    $region6: #{optimizer_forward.1} parent=1 // pred_check
      _
    $region7: #{optimizer_forward.1} parent=1 // pred_check_branch
      %33 = sbr.rel (0) target = $region9
    $region8: #{optimizer_forward.1} parent=1 // pred_region
      %s35 = ssub.s32 384, 384
      %36 = vsyncadd [#allocation4], %s35
      %s37 = sshll.u32 [#allocation3], 4
      %s38 = int_to_ptr.vmem [resolvable:$true] %s37
      %43 = dma.hbm_to_vmem [thread:$0]  %s1, 384, %s38, [#allocation4], 128, 128, 8
    $region9: #{optimizer_forward.1} parent=1 // pred_fallthru
      _
    // Predicated region
    $region10: #{optimizer_forward.1} parent=1 // pred_check
      _
    $region11: #{optimizer_forward.1} parent=1 // pred_check_branch
      %45 = sbr.rel (0) target = $region13
    $region12: #{optimizer_forward.1} parent=1 // pred_region
      %s47 = ssub.s32 384, 384
      %48 = vsyncadd [#allocation7], %s47
      %s49 = sshll.u32 [#allocation6], 4
      %s50 = int_to_ptr.vmem [resolvable:$true] %s49
      %55 = dma.hbm_to_vmem [thread:$0]  %s2, 384, %s50, [#allocation7], 128, 128, 8
    $region13: #{optimizer_forward.1} parent=1 // pred_fallthru
      _
    // Predicated region
    $region14: #{optimizer_forward.1} parent=1 // pred_check
      _
    $region15: #{optimizer_forward.1} parent=1 // pred_check_branch
      %57 = sbr.rel (0) target = $region17
    $region16: #{optimizer_forward.1} parent=1 // pred_region
      %s59 = ssub.s32 384, 384
      %60 = vsyncadd [#allocation7], %s59
      %s61 = sshll.u32 [#allocation8], 4
      %s62 = int_to_ptr.vmem [resolvable:$true] %s61
      %67 = dma.hbm_to_vmem [thread:$0]  %s3, 384, %s62, [#allocation7], 128, 128, 8
    $region17: #{optimizer_forward.1} parent=1 // pred_fallthru
      _
    // Predicated region
    $region18: #{optimizer_forward.1} parent=1 // pred_check
      _
    $region19: #{optimizer_forward.1} parent=1 // pred_check_branch
      %69 = sbr.rel (0) target = $region21
    $region20: #{optimizer_forward.1} parent=1 // pred_region
      %s71 = ssub.s32 384, 384
      %72 = vsyncadd [#allocation10], %s71
      %s73 = sshll.u32 [#allocation9], 4
      %s74 = int_to_ptr.vmem [resolvable:$true] %s73
      %79 = dma.hbm_to_vmem [thread:$0]  %s4, 384, %s74, [#allocation10], 128, 128, 8
    $region21: #{optimizer_forward.1} parent=1 // pred_fallthru
      _
    // Predicated region
    $region22: #{optimizer_forward.1} parent=1 // pred_check
      _
    $region23: #{optimizer_forward.1} parent=1 // pred_check_branch
      %81 = sbr.rel (0) target = $region25
    $region24: #{optimizer_forward.1} parent=1 // pred_region
      _
    $region25: #{optimizer_forward.1} parent=1 // pred_fallthru
      _
    // Predicated region
    $region26: #{optimizer_forward.1} parent=1 // pred_check
      _
    $region27: #{optimizer_forward.1} parent=1 // pred_check_branch
      %83 = sbr.rel (0) target = $region29
    $region28: #{optimizer_forward.1} parent=1 // pred_region
      _
    $region29: #{optimizer_forward.1} parent=1 // pred_fallthru
      _
    // Predicated region
    $region30: #{optimizer_forward.1} parent=1 // pred_check
      _
    $region31: #{optimizer_forward.1} parent=1 // pred_check_branch
      %85 = sbr.rel (0) target = $region33
    $region32: #{optimizer_forward.1} parent=1 // pred_region
      _
    $region33: #{optimizer_forward.1} parent=1 // pred_fallthru
      _
    // Predicated region
    $region34: #{optimizer_forward.1} parent=1 // pred_check
      _
    $region35: #{optimizer_forward.1} parent=1 // pred_check_branch
      %87 = sbr.rel (0) target = $region37
    $region36: #{optimizer_forward.1} parent=1 // pred_region
      _
    $region37: #{optimizer_forward.1} parent=1 // pred_fallthru
      _
    // Predicated region
    $region38: #{optimizer_forward.1} parent=1 // pred_check
      _
    $region39: #{optimizer_forward.1} parent=1 // pred_check_branch
      %89 = sbr.rel (0) target = $region41
    $region40: #{optimizer_forward.1} parent=1 // pred_region
      _
    $region41: #{optimizer_forward.1} parent=1 // pred_fallthru
      _
    // Predicated region
    $region42: #{optimizer_forward.1} parent=1 // pred_check
      _
    $region43: #{optimizer_forward.1} parent=1 // pred_check_branch
      %91 = sbr.rel (0) target = $region45
    $region44: #{optimizer_forward.1} parent=1 // pred_region
      _
    $region45: #{optimizer_forward.1} parent=1 // pred_fallthru
      _
    // Predicated region
    $region46: #{optimizer_forward.1} parent=1 // pred_check
      _
    $region47: #{optimizer_forward.1} parent=1 // pred_check_branch
      %93 = sbr.rel (0) target = $region49
    $region48: #{optimizer_forward.1} parent=1 // pred_region
      _
    $region49: #{optimizer_forward.1} parent=1 // pred_fallthru
      _
    // Predicated region
    $region50: #{optimizer_forward.1} parent=1 // pred_check
      _
    $region51: #{optimizer_forward.1} parent=1 // pred_check_branch
      %95 = sbr.rel (0) target = $region53
    $region52: #{optimizer_forward.1} parent=1 // pred_region
      %96 = dma.done [#allocation4], 384
    $region53: #{optimizer_forward.1} parent=1 // pred_fallthru
      _
    // Predicated region
    $region54: #{optimizer_forward.1} parent=1 // pred_check
      _
    $region55: #{optimizer_forward.1} parent=1 // pred_check_branch
      %98 = sbr.rel (0) target = $region57
    $region56: #{optimizer_forward.1} parent=1 // pred_region
      %99 = dma.done [#allocation7], 384
    $region57: #{optimizer_forward.1} parent=1 // pred_fallthru
      _
    // Predicated region
    $region58: #{optimizer_forward.1} parent=1 // pred_check
      _
    $region59: #{optimizer_forward.1} parent=1 // pred_check_branch
      %101 = sbr.rel (0) target = $region61
    $region60: #{optimizer_forward.1} parent=1 // pred_region
      %102 = dma.done [#allocation7], 384
    $region61: #{optimizer_forward.1} parent=1 // pred_fallthru
      _
    // Predicated region
    $region62: #{optimizer_forward.1} parent=1 // pred_check
      _
    $region63: #{optimizer_forward.1} parent=1 // pred_check_branch
      %104 = sbr.rel (0) target = $region65
    $region64: #{optimizer_forward.1} parent=1 // pred_region
      %105 = dma.done [#allocation10], 384
    $region65: #{optimizer_forward.1} parent=1 // pred_fallthru
      _
    %v106 = vld [vmem:[%s0] sm:$0x1]
    %vm107 = vcmask 1040384
    %v108 = vsel %vm107, %v106, 0.0
    %vm109 = vcmask 1046528
    %v110 = vsel %vm109, %v108, 1.0
    %v111 = vld [vmem:[#allocation3] sm:$0xff]
    %v112 = vld [vmem:[#allocation3 + $0x8] sm:$0xff]
    %v113 = vld [vmem:[#allocation3 + $0x10] sm:$0xff]
    %v114 = vld [vmem:[%s5] sm:$0xff]
    %v115 = vld [vmem:[%s5 + $0x8] sm:$0xff]
    %v116 = vld [vmem:[%s5 + $0x10] sm:$0xff]
    %v117 = vld [vmem:[%s5 + $0x18] sm:$0xff]
    %v118 = vld [vmem:[%s5 + $0x20] sm:$0xff]
    %v119 = vld [vmem:[%s5 + $0x28] sm:$0xff]
    %v120 = vld [vmem:[%s5 + $0x30] sm:$0xff]
    %v121 = vld [vmem:[%s5 + $0x38] sm:$0xff]
    %v122 = vld [vmem:[%s5 + $0x40] sm:$0xff]
    %v123 = vld [vmem:[%s5 + $0x48] sm:$0xff]
    %v124 = vld [vmem:[%s5 + $0x50] sm:$0xff]
    %v125 = vld [vmem:[%s5 + $0x58] sm:$0xff]
    %v126 = vld [vmem:[%s6] sm:$0xff]
    %v127 = vld [vmem:[%s6 + $0x8] sm:$0xff]
    %v128 = vld [vmem:[%s6 + $0x10] sm:$0xff]
    %v129 = vld [vmem:[%s6 + $0x18] sm:$0xff]
    %v130 = vld [vmem:[%s6 + $0x20] sm:$0xff]
    %v131 = vld [vmem:[%s6 + $0x28] sm:$0xff]
    %v132 = vld [vmem:[%s6 + $0x30] sm:$0xff]
    %v133 = vld [vmem:[%s6 + $0x38] sm:$0xff]
    %v134 = vld [vmem:[%s6 + $0x40] sm:$0xff]
    %v135 = vld [vmem:[%s6 + $0x48] sm:$0xff]
    %v136 = vld [vmem:[%s6 + $0x50] sm:$0xff]
    %v137 = vld [vmem:[%s6 + $0x58] sm:$0xff]
    %vm138 = vcmask 195584
    %v140 = vsel %vm138, %v126, 0
    %v143 = vsel %vm138, %v127, 0
    %v146 = vsel %vm138, %v128, 0
    %v149 = vsel %vm138, %v129, 0
    %v152 = vsel %vm138, %v130, 0
    %v155 = vsel %vm138, %v131, 0
    %v158 = vsel %vm138, %v132, 0
    %v161 = vsel %vm138, %v133, 0
    %v164 = vsel %vm138, %v134, 0
    %v167 = vsel %vm138, %v135, 0
    %v170 = vsel %vm138, %v136, 0
    %v173 = vsel %vm138, %v137, 0
    %175 = vmatprep.subr.mxu0 0.0
    %176 = vmatpush1.msra.mxu0 0.0
    %177 = vmatprep.subr.mxu0 0.0
    %178 = vmatpush1.msra.mxu0 0.0
    %179 = vmatprep.subr.mxu0 0.0
    %180 = vmatpush1.msra.mxu0 0.0
    %181 = vmatprep.subr.mxu0 0.0
    %182 = vmatpush1.msra.mxu0 0.0
    %183 = vmatprep.subr.mxu0 0.0
    %184 = vmatpush1.msra.mxu0 0.0
    %185 = vmatprep.subr.mxu0 0.0
    %186 = vmatpush1.msra.mxu0 0.0
    %187 = vmatprep.subr.mxu0 0.0
    %188 = vmatpush1.msra.mxu0 0.0
    %189 = vmatprep.subr.mxu0 0.0
    %190 = vmatpush1.msra.mxu0 0.0
    %191 = vmatprep.subr.mxu0 0.0
    %192 = vmatpush1.msra.mxu0 0.0
    %193 = vmatprep.subr.mxu0 0.0
    %194 = vmatpush1.msra.mxu0 0.0
    %195 = vmatprep.subr.mxu0 0.0
    %196 = vmatpush1.msra.mxu0 0.0
    %197 = vmatprep.subr.mxu0 0.0
    %198 = vmatpush1.msra.mxu0 0.0
    %199 = vmatprep.subr.mxu0 0.0
    %200 = vmatpush1.msra.mxu0 0.0
    %201 = vmatprep.subr.mxu0 0.0
    %202 = vmatpush1.msra.mxu0 %v113
    %203 = vmatprep.subr.mxu0 0.0
    %204 = vmatpush1.msra.mxu0 %v112
    %205 = vmatprep.subr.mxu0 0.0
    %206 = vmatpush1.msra.mxu0 %v111
    %207 = vmatprep.subr.mxu0 0.0
    %208 = vmatpush2.msra.mxu0 0.0
    %209 = vmatprep.subr.mxu0 0.0
    %210 = vmatpush2.msra.mxu0 0.0
    %211 = vmatprep.subr.mxu0 0.0
    %212 = vmatpush2.msra.mxu0 0.0
    %213 = vmatprep.subr.mxu0 0.0
    %214 = vmatpush2.msra.mxu0 0.0
    %215 = vmatprep.subr.mxu0 0.0
    %216 = vmatpush2.msra.mxu0 0.0
    %217 = vmatprep.subr.mxu0 0.0
    %218 = vmatpush2.msra.mxu0 0.0
    %219 = vmatprep.subr.mxu0 0.0
    %220 = vmatpush2.msra.mxu0 0.0
    %221 = vmatprep.subr.mxu0 0.0
    %222 = vmatpush2.msra.mxu0 0.0
    %223 = vmatprep.subr.mxu0 0.0
    %224 = vmatpush2.msra.mxu0 0.0
    %225 = vmatprep.subr.mxu0 0.0
    %226 = vmatpush2.msra.mxu0 0.0
    %227 = vmatprep.subr.mxu0 0.0
    %228 = vmatpush2.msra.mxu0 0.0
    %229 = vmatprep.subr.mxu0 0.0
    %230 = vmatpush2.msra.mxu0 0.0
    %231 = vmatprep.subr.mxu0 0.0
    %232 = vmatpush2.msra.mxu0 0.0
    %233 = vmatprep.subr.mxu0 0.0
    %234 = vmatpush2.msra.mxu0 0.0
    %235 = vmatprep.subr.mxu0 0.0
    %236 = vmatpush2.msra.mxu0 0.0
    %237 = vmatprep.subr.mxu0 0.0
    %238 = vmatpush2.msra.mxu0 0.0
    %239 = vmatprep.mubr.f32.mxu0 0.0
    %240 = vmatmul.mubr.f32.gmra.mxu0 %v140
    %v241 = vpop.f32.mrf.mxu0
    %v242 = vadd.f32 0.0, %v241
    %v243 = vpop.f32.mrf.mxu0
    %244 = vmatprep.mubr.f32.mxu0 0.0
    %245 = vmatmul.mubr.f32.gmra.mxu0 %v143
    %v246 = vpop.f32.mrf.mxu0
    %v247 = vadd.f32 0.0, %v246
    %v248 = vpop.f32.mrf.mxu0
    %249 = vmatprep.mubr.f32.mxu0 0.0
    %250 = vmatmul.mubr.f32.gmra.mxu0 %v146
    %v251 = vpop.f32.mrf.mxu0
    %v252 = vadd.f32 0.0, %v251
    %v253 = vpop.f32.mrf.mxu0
    %254 = vmatprep.mubr.f32.mxu0 0.0
    %255 = vmatmul.mubr.f32.gmra.mxu0 %v149
    %v256 = vpop.f32.mrf.mxu0
    %v257 = vadd.f32 0.0, %v256
    %v258 = vpop.f32.mrf.mxu0
    %259 = vmatprep.mubr.f32.mxu0 0.0
    %260 = vmatmul.mubr.f32.gmra.mxu0 %v152
    %v261 = vpop.f32.mrf.mxu0
    %v262 = vadd.f32 0.0, %v261
    %v263 = vpop.f32.mrf.mxu0
    %264 = vmatprep.mubr.f32.mxu0 0.0
    %265 = vmatmul.mubr.f32.gmra.mxu0 %v155
    %v266 = vpop.f32.mrf.mxu0
    %v267 = vadd.f32 0.0, %v266
    %v268 = vpop.f32.mrf.mxu0
    %269 = vmatprep.mubr.f32.mxu0 0.0
    %270 = vmatmul.mubr.f32.gmra.mxu0 %v158
    %v271 = vpop.f32.mrf.mxu0
    %v272 = vadd.f32 0.0, %v271
    %v273 = vpop.f32.mrf.mxu0
    %274 = vmatprep.mubr.f32.mxu0 0.0
    %275 = vmatmul.mubr.f32.gmra.mxu0 %v161
    %v276 = vpop.f32.mrf.mxu0
    %v277 = vadd.f32 0.0, %v276
    %v278 = vpop.f32.mrf.mxu0
    %279 = vmatprep.mubr.f32.mxu0 0.0
    %280 = vmatmul.mubr.f32.gmra.mxu0 %v164
    %v281 = vpop.f32.mrf.mxu0
    %v282 = vadd.f32 0.0, %v281
    %v283 = vpop.f32.mrf.mxu0
    %284 = vmatprep.mubr.f32.mxu0 0.0
    %285 = vmatmul.mubr.f32.gmra.mxu0 %v167
    %v286 = vpop.f32.mrf.mxu0
    %v287 = vadd.f32 0.0, %v286
    %v288 = vpop.f32.mrf.mxu0
    %289 = vmatprep.mubr.f32.mxu0 0.0
    %290 = vmatmul.mubr.f32.gmra.mxu0 %v170
    %v291 = vpop.f32.mrf.mxu0
    %v292 = vadd.f32 0.0, %v291
    %v293 = vpop.f32.mrf.mxu0
    %294 = vmatprep.mubr.f32.mxu0 0.0
    %295 = vmatmul.mubr.f32.gmra.mxu0 %v173
    %v296 = vpop.f32.mrf.mxu0
    %v297 = vadd.f32 0.0, %v296
    %v298 = vpop.f32.mrf.mxu0
    %299 = vdwg.mxu0
    %vm300 = vcmask 64512
    %v302 = vsel %vm300, %v114, 0
    %v305 = vsel %vm300, %v115, 0
    %v308 = vsel %vm300, %v116, 0
    %v311 = vsel %vm300, %v117, 0
    %v314 = vsel %vm300, %v118, 0
    %v317 = vsel %vm300, %v119, 0
    %v320 = vsel %vm300, %v120, 0
    %v323 = vsel %vm300, %v121, 0
    %v326 = vsel %vm300, %v122, 0
    %v329 = vsel %vm300, %v123, 0
    %v332 = vsel %vm300, %v124, 0
    %v335 = vsel %vm300, %v125, 0
    %337 = vmatprep.subr.mxu0 0.0
    %338 = vmatpush1.msra.mxu0 0.0
    %339 = vmatprep.subr.mxu0 0.0
    %340 = vmatpush1.msra.mxu0 0.0
    %341 = vmatprep.subr.mxu0 0.0
    %342 = vmatpush1.msra.mxu0 0.0
    %343 = vmatprep.subr.mxu0 0.0
    %344 = vmatpush1.msra.mxu0 0.0
    %345 = vmatprep.subr.mxu0 0.0
    %346 = vmatpush1.msra.mxu0 0.0
    %347 = vmatprep.subr.mxu0 0.0
    %348 = vmatpush1.msra.mxu0 0.0
    %349 = vmatprep.subr.mxu0 0.0
    %350 = vmatpush1.msra.mxu0 0.0
    %351 = vmatprep.subr.mxu0 0.0
    %352 = vmatpush1.msra.mxu0 0.0
    %353 = vmatprep.subr.mxu0 0.0
    %354 = vmatpush1.msra.mxu0 0.0
    %355 = vmatprep.subr.mxu0 0.0
    %356 = vmatpush1.msra.mxu0 0.0
    %357 = vmatprep.subr.mxu0 0.0
    %358 = vmatpush1.msra.mxu0 0.0
    %359 = vmatprep.subr.mxu0 0.0
    %360 = vmatpush1.msra.mxu0 0.0
    %361 = vmatprep.subr.mxu0 0.0
    %362 = vmatpush1.msra.mxu0 0.0
    %363 = vmatprep.subr.mxu0 0.0
    %364 = vmatpush1.msra.mxu0 0.0
    %365 = vmatprep.subr.mxu0 0.0
    %366 = vmatpush1.msra.mxu0 0.0
    %367 = vmatprep.subr.mxu0 0.0
    %368 = vmatpush1.msra.mxu0 %v110
    %369 = vmatprep.subr.mxu0 0.0
    %370 = vmatpush2.msra.mxu0 0.0
    %371 = vmatprep.subr.mxu0 0.0
    %372 = vmatpush2.msra.mxu0 0.0
    %373 = vmatprep.subr.mxu0 0.0
    %374 = vmatpush2.msra.mxu0 0.0
    %375 = vmatprep.subr.mxu0 0.0
    %376 = vmatpush2.msra.mxu0 0.0
    %377 = vmatprep.subr.mxu0 0.0
    %378 = vmatpush2.msra.mxu0 0.0
    %379 = vmatprep.subr.mxu0 0.0
    %380 = vmatpush2.msra.mxu0 0.0
    %381 = vmatprep.subr.mxu0 0.0
    %382 = vmatpush2.msra.mxu0 0.0
    %383 = vmatprep.subr.mxu0 0.0
    %384 = vmatpush2.msra.mxu0 0.0
    %385 = vmatprep.subr.mxu0 0.0
    %386 = vmatpush2.msra.mxu0 0.0
    %387 = vmatprep.subr.mxu0 0.0
    %388 = vmatpush2.msra.mxu0 0.0
    %389 = vmatprep.subr.mxu0 0.0
    %390 = vmatpush2.msra.mxu0 0.0
    %391 = vmatprep.subr.mxu0 0.0
    %392 = vmatpush2.msra.mxu0 0.0
    %393 = vmatprep.subr.mxu0 0.0
    %394 = vmatpush2.msra.mxu0 0.0
    %395 = vmatprep.subr.mxu0 0.0
    %396 = vmatpush2.msra.mxu0 0.0
    %397 = vmatprep.subr.mxu0 0.0
    %398 = vmatpush2.msra.mxu0 0.0
    %399 = vmatprep.subr.mxu0 0.0
    %400 = vmatpush2.msra.mxu0 0.0
    %401 = vmatprep.mubr.f32.mxu0 0.0
    %402 = vmatmul.mubr.f32.gmra.mxu0 %v302
    %v403 = vpop.f32.mrf.mxu0
    %v404 = vadd.f32 %v242, %v403
    %v405 = vpop.f32.mrf.mxu0
    %406 = vmatprep.mubr.f32.mxu0 0.0
    %407 = vmatmul.mubr.f32.gmra.mxu0 %v305
    %v408 = vpop.f32.mrf.mxu0
    %v409 = vadd.f32 %v247, %v408
    %v410 = vpop.f32.mrf.mxu0
    %411 = vmatprep.mubr.f32.mxu0 0.0
    %412 = vmatmul.mubr.f32.gmra.mxu0 %v308
    %v413 = vpop.f32.mrf.mxu0
    %v414 = vadd.f32 %v252, %v413
    %v415 = vpop.f32.mrf.mxu0
    %416 = vmatprep.mubr.f32.mxu0 0.0
    %417 = vmatmul.mubr.f32.gmra.mxu0 %v311
    %v418 = vpop.f32.mrf.mxu0
    %v419 = vadd.f32 %v257, %v418
    %v420 = vpop.f32.mrf.mxu0
    %421 = vmatprep.mubr.f32.mxu0 0.0
    %422 = vmatmul.mubr.f32.gmra.mxu0 %v314
    %v423 = vpop.f32.mrf.mxu0
    %v424 = vadd.f32 %v262, %v423
    %v425 = vpop.f32.mrf.mxu0
    %426 = vmatprep.mubr.f32.mxu0 0.0
    %427 = vmatmul.mubr.f32.gmra.mxu0 %v317
    %v428 = vpop.f32.mrf.mxu0
    %v429 = vadd.f32 %v267, %v428
    %v430 = vpop.f32.mrf.mxu0
    %431 = vmatprep.mubr.f32.mxu0 0.0
    %432 = vmatmul.mubr.f32.gmra.mxu0 %v320
    %v433 = vpop.f32.mrf.mxu0
    %v434 = vadd.f32 %v272, %v433
    %v435 = vpop.f32.mrf.mxu0
    %436 = vmatprep.mubr.f32.mxu0 0.0
    %437 = vmatmul.mubr.f32.gmra.mxu0 %v323
    %v438 = vpop.f32.mrf.mxu0
    %v439 = vadd.f32 %v277, %v438
    %v440 = vpop.f32.mrf.mxu0
    %441 = vmatprep.mubr.f32.mxu0 0.0
    %442 = vmatmul.mubr.f32.gmra.mxu0 %v326
    %v443 = vpop.f32.mrf.mxu0
    %v444 = vadd.f32 %v282, %v443
    %v445 = vpop.f32.mrf.mxu0
    %446 = vmatprep.mubr.f32.mxu0 0.0
    %447 = vmatmul.mubr.f32.gmra.mxu0 %v329
    %v448 = vpop.f32.mrf.mxu0
    %v449 = vadd.f32 %v287, %v448
    %v450 = vpop.f32.mrf.mxu0
    %451 = vmatprep.mubr.f32.mxu0 0.0
    %452 = vmatmul.mubr.f32.gmra.mxu0 %v332
    %v453 = vpop.f32.mrf.mxu0
    %v454 = vadd.f32 %v292, %v453
    %v455 = vpop.f32.mrf.mxu0
    %456 = vmatprep.mubr.f32.mxu0 0.0
    %457 = vmatmul.mubr.f32.gmra.mxu0 %v335
    %v458 = vpop.f32.mrf.mxu0
    %v459 = vadd.f32 %v297, %v458
    %v460 = vpop.f32.mrf.mxu0
    %461 = vdwg.mxu0
    %v462 = vld [vmem:[#allocation6] sm:$0xff]
    %v463 = vld [vmem:[#allocation6 + $0x8] sm:$0xff]
    %v464 = vld [vmem:[#allocation6 + $0x10] sm:$0xff]
    %v465 = vxor.u32 %v404, 2147483648
    %v466 = vxor.u32 %v409, 2147483648
    %v467 = vxor.u32 %v414, 2147483648
    %v468 = vmul.f32 %v465, 1.442695
    %v469 = vpow.pop %v468
    %v470 = vmul.f32 %v466, 1.442695
    %v471 = vpow.pop %v470
    %v472 = vmul.f32 %v467, 1.442695
    %v473 = vpow.pop %v472
    %v474 = vadd.f32 %v469, 1.0
    %v475 = vadd.f32 %v471, 1.0
    %v476 = vadd.f32 %v473, 1.0
    %v477 = vrcp.pop %v474
    %v478 = vmul.f32 1.0, %v477
    %v479 = vrcp.pop %v475
    %v480 = vmul.f32 1.0, %v479
    %v481 = vrcp.pop %v476
    %v482 = vmul.f32 1.0, %v481
    %v483 = vxor.u32 %v419, 2147483648
    %v484 = vxor.u32 %v424, 2147483648
    %v485 = vxor.u32 %v429, 2147483648
    %v486 = vmul.f32 %v483, 1.442695
    %v487 = vpow.pop %v486
    %v488 = vmul.f32 %v484, 1.442695
    %v489 = vpow.pop %v488
    %v490 = vmul.f32 %v485, 1.442695
    %v491 = vpow.pop %v490
    %v492 = vadd.f32 %v487, 1.0
    %v493 = vadd.f32 %v489, 1.0
    %v494 = vadd.f32 %v491, 1.0
    %v495 = vrcp.pop %v492
    %v496 = vmul.f32 1.0, %v495
    %v497 = vrcp.pop %v493
    %v498 = vmul.f32 1.0, %v497
    %v499 = vrcp.pop %v494
    %v500 = vmul.f32 1.0, %v499
    %v501 = vtanh.pop %v434
    %v502 = vtanh.pop %v439
    %v503 = vtanh.pop %v444
    %v504 = vxor.u32 %v449, 2147483648
    %v505 = vxor.u32 %v454, 2147483648
    %v506 = vxor.u32 %v459, 2147483648
    %v507 = vmul.f32 %v504, 1.442695
    %v508 = vpow.pop %v507
    %v509 = vmul.f32 %v505, 1.442695
    %v510 = vpow.pop %v509
    %v511 = vmul.f32 %v506, 1.442695
    %v512 = vpow.pop %v511
    %v513 = vadd.f32 %v508, 1.0
    %v514 = vadd.f32 %v510, 1.0
    %v515 = vadd.f32 %v512, 1.0
    %v516 = vrcp.pop %v513
    %v517 = vmul.f32 1.0, %v516
    %v518 = vrcp.pop %v514
    %v519 = vmul.f32 1.0, %v518
    %v520 = vrcp.pop %v515
    %v521 = vmul.f32 1.0, %v520
    %v522 = vmul.f32 %v496, %v462
    %v523 = vmul.f32 %v498, %v463
    %v524 = vmul.f32 %v500, %v464
    %v525 = vmul.f32 %v478, %v501
    %v526 = vmul.f32 %v480, %v502
    %v527 = vmul.f32 %v482, %v503
    %v528 = vadd.f32 %v522, %v525
    %v529 = vadd.f32 %v523, %v526
    %v530 = vadd.f32 %v524, %v527
    %v531 = vtanh.pop %v528
    %v532 = vtanh.pop %v529
    %v533 = vtanh.pop %v530
    %v534 = vmul.f32 %v517, %v531
    %v535 = vmul.f32 %v519, %v532
    %v536 = vmul.f32 %v521, %v533
    %v537 = vld [vmem:[#allocation8] sm:$0xff]
    %v538 = vld [vmem:[#allocation8 + $0x8] sm:$0xff]
    %v539 = vld [vmem:[#allocation8 + $0x10] sm:$0xff]
    %v540 = vld [vmem:[%s7] sm:$0xff]
    %v541 = vld [vmem:[%s7 + $0x8] sm:$0xff]
    %v542 = vld [vmem:[%s7 + $0x10] sm:$0xff]
    %v543 = vld [vmem:[%s7 + $0x18] sm:$0xff]
    %v544 = vld [vmem:[%s7 + $0x20] sm:$0xff]
    %v545 = vld [vmem:[%s7 + $0x28] sm:$0xff]
    %v546 = vld [vmem:[%s7 + $0x30] sm:$0xff]
    %v547 = vld [vmem:[%s7 + $0x38] sm:$0xff]
    %v548 = vld [vmem:[%s7 + $0x40] sm:$0xff]
    %v549 = vld [vmem:[%s7 + $0x48] sm:$0xff]
    %v550 = vld [vmem:[%s7 + $0x50] sm:$0xff]
    %v551 = vld [vmem:[%s7 + $0x58] sm:$0xff]
    %v552 = vld [vmem:[%s8] sm:$0xff]
    %v553 = vld [vmem:[%s8 + $0x8] sm:$0xff]
    %v554 = vld [vmem:[%s8 + $0x10] sm:$0xff]
    %v555 = vld [vmem:[%s8 + $0x18] sm:$0xff]
    %v556 = vld [vmem:[%s8 + $0x20] sm:$0xff]
    %v557 = vld [vmem:[%s8 + $0x28] sm:$0xff]
    %v558 = vld [vmem:[%s8 + $0x30] sm:$0xff]
    %v559 = vld [vmem:[%s8 + $0x38] sm:$0xff]
    %v560 = vld [vmem:[%s8 + $0x40] sm:$0xff]
    %v561 = vld [vmem:[%s8 + $0x48] sm:$0xff]
    %v562 = vld [vmem:[%s8 + $0x50] sm:$0xff]
    %v563 = vld [vmem:[%s8 + $0x58] sm:$0xff]
    %v565 = vsel %vm138, %v552, 0
    %v568 = vsel %vm138, %v553, 0
    %v571 = vsel %vm138, %v554, 0
    %v574 = vsel %vm138, %v555, 0
    %v577 = vsel %vm138, %v556, 0
    %v580 = vsel %vm138, %v557, 0
    %v583 = vsel %vm138, %v558, 0
    %v586 = vsel %vm138, %v559, 0
    %v589 = vsel %vm138, %v560, 0
    %v592 = vsel %vm138, %v561, 0
    %v595 = vsel %vm138, %v562, 0
    %v598 = vsel %vm138, %v563, 0
    %600 = vmatprep.subr.mxu0 0.0
    %601 = vmatpush1.msra.mxu0 0.0
    %602 = vmatprep.subr.mxu0 0.0
    %603 = vmatpush1.msra.mxu0 0.0
    %604 = vmatprep.subr.mxu0 0.0
    %605 = vmatpush1.msra.mxu0 0.0
    %606 = vmatprep.subr.mxu0 0.0
    %607 = vmatpush1.msra.mxu0 0.0
    %608 = vmatprep.subr.mxu0 0.0
    %609 = vmatpush1.msra.mxu0 0.0
    %610 = vmatprep.subr.mxu0 0.0
    %611 = vmatpush1.msra.mxu0 0.0
    %612 = vmatprep.subr.mxu0 0.0
    %613 = vmatpush1.msra.mxu0 0.0
    %614 = vmatprep.subr.mxu0 0.0
    %615 = vmatpush1.msra.mxu0 0.0
    %616 = vmatprep.subr.mxu0 0.0
    %617 = vmatpush1.msra.mxu0 0.0
    %618 = vmatprep.subr.mxu0 0.0
    %619 = vmatpush1.msra.mxu0 0.0
    %620 = vmatprep.subr.mxu0 0.0
    %621 = vmatpush1.msra.mxu0 0.0
    %622 = vmatprep.subr.mxu0 0.0
    %623 = vmatpush1.msra.mxu0 0.0
    %624 = vmatprep.subr.mxu0 0.0
    %625 = vmatpush1.msra.mxu0 0.0
    %626 = vmatprep.subr.mxu0 0.0
    %627 = vmatpush1.msra.mxu0 %v539
    %628 = vmatprep.subr.mxu0 0.0
    %629 = vmatpush1.msra.mxu0 %v538
    %630 = vmatprep.subr.mxu0 0.0
    %631 = vmatpush1.msra.mxu0 %v537
    %632 = vmatprep.subr.mxu0 0.0
    %633 = vmatpush2.msra.mxu0 0.0
    %634 = vmatprep.subr.mxu0 0.0
    %635 = vmatpush2.msra.mxu0 0.0
    %636 = vmatprep.subr.mxu0 0.0
    %637 = vmatpush2.msra.mxu0 0.0
    %638 = vmatprep.subr.mxu0 0.0
    %639 = vmatpush2.msra.mxu0 0.0
    %640 = vmatprep.subr.mxu0 0.0
    %641 = vmatpush2.msra.mxu0 0.0
    %642 = vmatprep.subr.mxu0 0.0
    %643 = vmatpush2.msra.mxu0 0.0
    %644 = vmatprep.subr.mxu0 0.0
    %645 = vmatpush2.msra.mxu0 0.0
    %646 = vmatprep.subr.mxu0 0.0
    %647 = vmatpush2.msra.mxu0 0.0
    %648 = vmatprep.subr.mxu0 0.0
    %649 = vmatpush2.msra.mxu0 0.0
    %650 = vmatprep.subr.mxu0 0.0
    %651 = vmatpush2.msra.mxu0 0.0
    %652 = vmatprep.subr.mxu0 0.0
    %653 = vmatpush2.msra.mxu0 0.0
    %654 = vmatprep.subr.mxu0 0.0
    %655 = vmatpush2.msra.mxu0 0.0
    %656 = vmatprep.subr.mxu0 0.0
    %657 = vmatpush2.msra.mxu0 0.0
    %658 = vmatprep.subr.mxu0 0.0
    %659 = vmatpush2.msra.mxu0 0.0
    %660 = vmatprep.subr.mxu0 0.0
    %661 = vmatpush2.msra.mxu0 0.0
    %662 = vmatprep.subr.mxu0 0.0
    %663 = vmatpush2.msra.mxu0 0.0
    %664 = vmatprep.mubr.f32.mxu0 0.0
    %665 = vmatmul.mubr.f32.gmra.mxu0 %v565
    %v666 = vpop.f32.mrf.mxu0
    %v667 = vadd.f32 0.0, %v666
    %v668 = vpop.f32.mrf.mxu0
    %669 = vmatprep.mubr.f32.mxu0 0.0
    %670 = vmatmul.mubr.f32.gmra.mxu0 %v568
    %v671 = vpop.f32.mrf.mxu0
    %v672 = vadd.f32 0.0, %v671
    %v673 = vpop.f32.mrf.mxu0
    %674 = vmatprep.mubr.f32.mxu0 0.0
    %675 = vmatmul.mubr.f32.gmra.mxu0 %v571
    %v676 = vpop.f32.mrf.mxu0
    %v677 = vadd.f32 0.0, %v676
    %v678 = vpop.f32.mrf.mxu0
    %679 = vmatprep.mubr.f32.mxu0 0.0
    %680 = vmatmul.mubr.f32.gmra.mxu0 %v574
    %v681 = vpop.f32.mrf.mxu0
    %v682 = vadd.f32 0.0, %v681
    %v683 = vpop.f32.mrf.mxu0
    %684 = vmatprep.mubr.f32.mxu0 0.0
    %685 = vmatmul.mubr.f32.gmra.mxu0 %v577
    %v686 = vpop.f32.mrf.mxu0
    %v687 = vadd.f32 0.0, %v686
    %v688 = vpop.f32.mrf.mxu0
    %689 = vmatprep.mubr.f32.mxu0 0.0
    %690 = vmatmul.mubr.f32.gmra.mxu0 %v580
    %v691 = vpop.f32.mrf.mxu0
    %v692 = vadd.f32 0.0, %v691
    %v693 = vpop.f32.mrf.mxu0
    %694 = vmatprep.mubr.f32.mxu0 0.0
    %695 = vmatmul.mubr.f32.gmra.mxu0 %v583
    %v696 = vpop.f32.mrf.mxu0
    %v697 = vadd.f32 0.0, %v696
    %v698 = vpop.f32.mrf.mxu0
    %699 = vmatprep.mubr.f32.mxu0 0.0
    %700 = vmatmul.mubr.f32.gmra.mxu0 %v586
    %v701 = vpop.f32.mrf.mxu0
    %v702 = vadd.f32 0.0, %v701
    %v703 = vpop.f32.mrf.mxu0
    %704 = vmatprep.mubr.f32.mxu0 0.0
    %705 = vmatmul.mubr.f32.gmra.mxu0 %v589
    %v706 = vpop.f32.mrf.mxu0
    %v707 = vadd.f32 0.0, %v706
    %v708 = vpop.f32.mrf.mxu0
    %709 = vmatprep.mubr.f32.mxu0 0.0
    %710 = vmatmul.mubr.f32.gmra.mxu0 %v592
    %v711 = vpop.f32.mrf.mxu0
    %v712 = vadd.f32 0.0, %v711
    %v713 = vpop.f32.mrf.mxu0
    %714 = vmatprep.mubr.f32.mxu0 0.0
    %715 = vmatmul.mubr.f32.gmra.mxu0 %v595
    %v716 = vpop.f32.mrf.mxu0
    %v717 = vadd.f32 0.0, %v716
    %v718 = vpop.f32.mrf.mxu0
    %719 = vmatprep.mubr.f32.mxu0 0.0
    %720 = vmatmul.mubr.f32.gmra.mxu0 %v598
    %v721 = vpop.f32.mrf.mxu0
    %v722 = vadd.f32 0.0, %v721
    %v723 = vpop.f32.mrf.mxu0
    %724 = vdwg.mxu0
    %v726 = vsel %vm138, %v540, 0
    %v729 = vsel %vm138, %v541, 0
    %v732 = vsel %vm138, %v542, 0
    %v735 = vsel %vm138, %v543, 0
    %v738 = vsel %vm138, %v544, 0
    %v741 = vsel %vm138, %v545, 0
    %v744 = vsel %vm138, %v546, 0
    %v747 = vsel %vm138, %v547, 0
    %v750 = vsel %vm138, %v548, 0
    %v753 = vsel %vm138, %v549, 0
    %v756 = vsel %vm138, %v550, 0
    %v759 = vsel %vm138, %v551, 0
    %761 = vmatprep.subr.mxu0 0.0
    %762 = vmatpush1.msra.mxu0 0.0
    %763 = vmatprep.subr.mxu0 0.0
    %764 = vmatpush1.msra.mxu0 0.0
    %765 = vmatprep.subr.mxu0 0.0
    %766 = vmatpush1.msra.mxu0 0.0
    %767 = vmatprep.subr.mxu0 0.0
    %768 = vmatpush1.msra.mxu0 0.0
    %769 = vmatprep.subr.mxu0 0.0
    %770 = vmatpush1.msra.mxu0 0.0
    %771 = vmatprep.subr.mxu0 0.0
    %772 = vmatpush1.msra.mxu0 0.0
    %773 = vmatprep.subr.mxu0 0.0
    %774 = vmatpush1.msra.mxu0 0.0
    %775 = vmatprep.subr.mxu0 0.0
    %776 = vmatpush1.msra.mxu0 0.0
    %777 = vmatprep.subr.mxu0 0.0
    %778 = vmatpush1.msra.mxu0 0.0
    %779 = vmatprep.subr.mxu0 0.0
    %780 = vmatpush1.msra.mxu0 0.0
    %781 = vmatprep.subr.mxu0 0.0
    %782 = vmatpush1.msra.mxu0 0.0
    %783 = vmatprep.subr.mxu0 0.0
    %784 = vmatpush1.msra.mxu0 0.0
    %785 = vmatprep.subr.mxu0 0.0
    %786 = vmatpush1.msra.mxu0 0.0
    %787 = vmatprep.subr.mxu0 0.0
    %788 = vmatpush1.msra.mxu0 %v536
    %789 = vmatprep.subr.mxu0 0.0
    %790 = vmatpush1.msra.mxu0 %v535
    %791 = vmatprep.subr.mxu0 0.0
    %792 = vmatpush1.msra.mxu0 %v534
    %793 = vmatprep.subr.mxu0 0.0
    %794 = vmatpush2.msra.mxu0 0.0
    %795 = vmatprep.subr.mxu0 0.0
    %796 = vmatpush2.msra.mxu0 0.0
    %797 = vmatprep.subr.mxu0 0.0
    %798 = vmatpush2.msra.mxu0 0.0
    %799 = vmatprep.subr.mxu0 0.0
    %800 = vmatpush2.msra.mxu0 0.0
    %801 = vmatprep.subr.mxu0 0.0
    %802 = vmatpush2.msra.mxu0 0.0
    %803 = vmatprep.subr.mxu0 0.0
    %804 = vmatpush2.msra.mxu0 0.0
    %805 = vmatprep.subr.mxu0 0.0
    %806 = vmatpush2.msra.mxu0 0.0
    %807 = vmatprep.subr.mxu0 0.0
    %808 = vmatpush2.msra.mxu0 0.0
    %809 = vmatprep.subr.mxu0 0.0
    %810 = vmatpush2.msra.mxu0 0.0
    %811 = vmatprep.subr.mxu0 0.0
    %812 = vmatpush2.msra.mxu0 0.0
    %813 = vmatprep.subr.mxu0 0.0
    %814 = vmatpush2.msra.mxu0 0.0
    %815 = vmatprep.subr.mxu0 0.0
    %816 = vmatpush2.msra.mxu0 0.0
    %817 = vmatprep.subr.mxu0 0.0
    %818 = vmatpush2.msra.mxu0 0.0
    %819 = vmatprep.subr.mxu0 0.0
    %820 = vmatpush2.msra.mxu0 0.0
    %821 = vmatprep.subr.mxu0 0.0
    %822 = vmatpush2.msra.mxu0 0.0
    %823 = vmatprep.subr.mxu0 0.0
    %824 = vmatpush2.msra.mxu0 0.0
    %825 = vmatprep.mubr.f32.mxu0 0.0
    %826 = vmatmul.mubr.f32.gmra.mxu0 %v726
    %v827 = vpop.f32.mrf.mxu0
    %v828 = vadd.f32 %v667, %v827
    %v829 = vpop.f32.mrf.mxu0
    %830 = vmatprep.mubr.f32.mxu0 0.0
    %831 = vmatmul.mubr.f32.gmra.mxu0 %v729
    %v832 = vpop.f32.mrf.mxu0
    %v833 = vadd.f32 %v672, %v832
    %v834 = vpop.f32.mrf.mxu0
    %835 = vmatprep.mubr.f32.mxu0 0.0
    %836 = vmatmul.mubr.f32.gmra.mxu0 %v732
    %v837 = vpop.f32.mrf.mxu0
    %v838 = vadd.f32 %v677, %v837
    %v839 = vpop.f32.mrf.mxu0
    %840 = vmatprep.mubr.f32.mxu0 0.0
    %841 = vmatmul.mubr.f32.gmra.mxu0 %v735
    %v842 = vpop.f32.mrf.mxu0
    %v843 = vadd.f32 %v682, %v842
    %v844 = vpop.f32.mrf.mxu0
    %845 = vmatprep.mubr.f32.mxu0 0.0
    %846 = vmatmul.mubr.f32.gmra.mxu0 %v738
    %v847 = vpop.f32.mrf.mxu0
    %v848 = vadd.f32 %v687, %v847
    %v849 = vpop.f32.mrf.mxu0
    %850 = vmatprep.mubr.f32.mxu0 0.0
    %851 = vmatmul.mubr.f32.gmra.mxu0 %v741
    %v852 = vpop.f32.mrf.mxu0
    %v853 = vadd.f32 %v692, %v852
    %v854 = vpop.f32.mrf.mxu0
    %855 = vmatprep.mubr.f32.mxu0 0.0
    %856 = vmatmul.mubr.f32.gmra.mxu0 %v744
    %v857 = vpop.f32.mrf.mxu0
    %v858 = vadd.f32 %v697, %v857
    %v859 = vpop.f32.mrf.mxu0
    %860 = vmatprep.mubr.f32.mxu0 0.0
    %861 = vmatmul.mubr.f32.gmra.mxu0 %v747
    %v862 = vpop.f32.mrf.mxu0
    %v863 = vadd.f32 %v702, %v862
    %v864 = vpop.f32.mrf.mxu0
    %865 = vmatprep.mubr.f32.mxu0 0.0
    %866 = vmatmul.mubr.f32.gmra.mxu0 %v750
    %v867 = vpop.f32.mrf.mxu0
    %v868 = vadd.f32 %v707, %v867
    %v869 = vpop.f32.mrf.mxu0
    %870 = vmatprep.mubr.f32.mxu0 0.0
    %871 = vmatmul.mubr.f32.gmra.mxu0 %v753
    %v872 = vpop.f32.mrf.mxu0
    %v873 = vadd.f32 %v712, %v872
    %v874 = vpop.f32.mrf.mxu0
    %875 = vmatprep.mubr.f32.mxu0 0.0
    %876 = vmatmul.mubr.f32.gmra.mxu0 %v756
    %v877 = vpop.f32.mrf.mxu0
    %v878 = vadd.f32 %v717, %v877
    %v879 = vpop.f32.mrf.mxu0
    %880 = vmatprep.mubr.f32.mxu0 0.0
    %881 = vmatmul.mubr.f32.gmra.mxu0 %v759
    %v882 = vpop.f32.mrf.mxu0
    %v883 = vadd.f32 %v722, %v882
    %v884 = vpop.f32.mrf.mxu0
    %885 = vdwg.mxu0
    %v886 = vld [vmem:[%s9] sm:$0xff]
    %v887 = vld [vmem:[%s9 + $0x8] sm:$0xff]
    %v888 = vld [vmem:[%s9 + $0x10] sm:$0xff]
    %v889 = vld [vmem:[%s9 + $0x18] sm:$0xff]
    %v890 = vld [vmem:[%s9 + $0x20] sm:$0xff]
    %v891 = vld [vmem:[%s9 + $0x28] sm:$0xff]
    %v892 = vld [vmem:[%s9 + $0x30] sm:$0xff]
    %v893 = vld [vmem:[%s9 + $0x38] sm:$0xff]
    %v894 = vld [vmem:[%s9 + $0x40] sm:$0xff]
    %v895 = vld [vmem:[%s9 + $0x48] sm:$0xff]
    %v896 = vld [vmem:[%s9 + $0x50] sm:$0xff]
    %v897 = vld [vmem:[%s9 + $0x58] sm:$0xff]
    %899 = vset.pattern.permute.xlu0 0
    %900 = vperm.xlu0 %899, %v886
    %v901 = vpop.permute.xlu0 %900
    %904 = vset.pattern.permute.xlu0 0
    %905 = vperm.xlu0 %904, %v887
    %v906 = vpop.permute.xlu0 %905
    %909 = vset.pattern.permute.xlu0 0
    %910 = vperm.xlu0 %909, %v888
    %v911 = vpop.permute.xlu0 %910
    %914 = vset.pattern.permute.xlu0 0
    %915 = vperm.xlu0 %914, %v889
    %v916 = vpop.permute.xlu0 %915
    %919 = vset.pattern.permute.xlu0 0
    %920 = vperm.xlu0 %919, %v890
    %v921 = vpop.permute.xlu0 %920
    %924 = vset.pattern.permute.xlu0 0
    %925 = vperm.xlu0 %924, %v891
    %v926 = vpop.permute.xlu0 %925
    %929 = vset.pattern.permute.xlu0 0
    %930 = vperm.xlu0 %929, %v892
    %v931 = vpop.permute.xlu0 %930
    %934 = vset.pattern.permute.xlu0 0
    %935 = vperm.xlu0 %934, %v893
    %v936 = vpop.permute.xlu0 %935
    %939 = vset.pattern.permute.xlu0 0
    %940 = vperm.xlu0 %939, %v894
    %v941 = vpop.permute.xlu0 %940
    %944 = vset.pattern.permute.xlu0 0
    %945 = vperm.xlu0 %944, %v895
    %v946 = vpop.permute.xlu0 %945
    %949 = vset.pattern.permute.xlu0 0
    %950 = vperm.xlu0 %949, %v896
    %v951 = vpop.permute.xlu0 %950
    %954 = vset.pattern.permute.xlu0 0
    %955 = vperm.xlu0 %954, %v897
    %v956 = vpop.permute.xlu0 %955
    %v958 = vadd.f32 %v828, %v901
    %v959 = vadd.f32 %v833, %v906
    %v960 = vadd.f32 %v838, %v911
    %v961 = vadd.f32 %v843, %v916
    %v962 = vadd.f32 %v848, %v921
    %v963 = vadd.f32 %v853, %v926
    %v964 = vadd.f32 %v858, %v931
    %v965 = vadd.f32 %v863, %v936
    %v966 = vadd.f32 %v868, %v941
    %v967 = vadd.f32 %v873, %v946
    %v968 = vadd.f32 %v878, %v951
    %v969 = vadd.f32 %v883, %v956
    %v970 = vld [vmem:[#allocation9] sm:$0xff]
    %v971 = vld [vmem:[#allocation9 + $0x8] sm:$0xff]
    %v972 = vld [vmem:[#allocation9 + $0x10] sm:$0xff]
    %v973 = vxor.u32 %v958, 2147483648
    %v974 = vxor.u32 %v959, 2147483648
    %v975 = vxor.u32 %v960, 2147483648
    %v976 = vmul.f32 %v973, 1.442695
    %v977 = vpow.pop %v976
    %v978 = vmul.f32 %v974, 1.442695
    %v979 = vpow.pop %v978
    %v980 = vmul.f32 %v975, 1.442695
    %v981 = vpow.pop %v980
    %v982 = vadd.f32 %v977, 1.0
    %v983 = vadd.f32 %v979, 1.0
    %v984 = vadd.f32 %v981, 1.0
    %v985 = vrcp.pop %v982
    %v986 = vmul.f32 1.0, %v985
    %v987 = vrcp.pop %v983
    %v988 = vmul.f32 1.0, %v987
    %v989 = vrcp.pop %v984
    %v990 = vmul.f32 1.0, %v989
    %v991 = vxor.u32 %v961, 2147483648
    %v992 = vxor.u32 %v962, 2147483648
    %v993 = vxor.u32 %v963, 2147483648
    %v994 = vmul.f32 %v991, 1.442695
    %v995 = vpow.pop %v994
    %v996 = vmul.f32 %v992, 1.442695
    %v997 = vpow.pop %v996
    %v998 = vmul.f32 %v993, 1.442695
    %v999 = vpow.pop %v998
    %v1000 = vadd.f32 %v995, 1.0
    %v1001 = vadd.f32 %v997, 1.0
    %v1002 = vadd.f32 %v999, 1.0
    %v1003 = vrcp.pop %v1000
    %v1004 = vmul.f32 1.0, %v1003
    %v1005 = vrcp.pop %v1001
    %v1006 = vmul.f32 1.0, %v1005
    %v1007 = vrcp.pop %v1002
    %v1008 = vmul.f32 1.0, %v1007
    %v1009 = vtanh.pop %v964
    %v1010 = vtanh.pop %v965
    %v1011 = vtanh.pop %v966
    %v1012 = vxor.u32 %v967, 2147483648
    %v1013 = vxor.u32 %v968, 2147483648
    %v1014 = vxor.u32 %v969, 2147483648
    %v1015 = vmul.f32 %v1012, 1.442695
    %v1016 = vpow.pop %v1015
    %v1017 = vmul.f32 %v1013, 1.442695
    %v1018 = vpow.pop %v1017
    %v1019 = vmul.f32 %v1014, 1.442695
    %v1020 = vpow.pop %v1019
    %v1021 = vadd.f32 %v1016, 1.0
    %v1022 = vadd.f32 %v1018, 1.0
    %v1023 = vadd.f32 %v1020, 1.0
    %v1024 = vrcp.pop %v1021
    %v1025 = vmul.f32 1.0, %v1024
    %v1026 = vrcp.pop %v1022
    %v1027 = vmul.f32 1.0, %v1026
    %v1028 = vrcp.pop %v1023
    %v1029 = vmul.f32 1.0, %v1028
    %v1030 = vmul.f32 %v1004, %v970
    %v1031 = vmul.f32 %v1006, %v971
    %v1032 = vmul.f32 %v1008, %v972
    %v1033 = vmul.f32 %v986, %v1009
    %v1034 = vmul.f32 %v988, %v1010
    %v1035 = vmul.f32 %v990, %v1011
    %v1036 = vadd.f32 %v1030, %v1033
    %v1037 = vadd.f32 %v1031, %v1034
    %v1038 = vadd.f32 %v1032, %v1035
    %v1039 = vtanh.pop %v1036
    %v1040 = vtanh.pop %v1037
    %v1041 = vtanh.pop %v1038
    %v1042 = vmul.f32 %v1025, %v1039
    %v1043 = vmul.f32 %v1027, %v1040
    %v1044 = vmul.f32 %v1029, %v1041
    %v1045 = vld [vmem:[%s10] sm:$0xff]
    %v1046 = vld [vmem:[%s10 + $0x8] sm:$0xff]
    %v1047 = vld [vmem:[%s10 + $0x10] sm:$0xff]
    %1049 = vset.pattern.permute.xlu0 0
    %1050 = vperm.xlu0 %1049, %v1045
    %v1051 = vpop.permute.xlu0 %1050
    %1054 = vset.pattern.permute.xlu0 0
    %1055 = vperm.xlu0 %1054, %v1046
    %v1056 = vpop.permute.xlu0 %1055
    %1059 = vset.pattern.permute.xlu0 0
    %1060 = vperm.xlu0 %1059, %v1047
    %v1061 = vpop.permute.xlu0 %1060
    %v1063 = vmul.f32 %v1042, %v1051
    %v1064 = vmul.f32 %v1043, %v1056
    %v1065 = vmul.f32 %v1044, %v1061
    %v1066 = vadd.f32 %v1063, %v1064
    %v1067 = vadd.f32 %v1066, %v1065
    %v1068 = vrot.slane %v1067, 4
    %v1069 = vadd.f32 %v1067, %v1068
    %v1070 = vrot.slane %v1069, 2
    %v1071 = vadd.f32 %v1069, %v1070
    %v1072 = vrot.slane %v1071, 1
    %v1073 = vadd.f32 %v1071, %v1072
    %v1074 = vld [vmem:[#allocation2] sm:$0x1]
    %1076 = vset.pattern.permute.xlu0 0
    %1077 = vperm.xlu0 %1076, %v1074
    %v1078 = vpop.permute.xlu0 %1077
    %v1080 = vlaneseq
    %v1081 = vshrl.u32 %v1080, 7
    %v1082 = vsub.s32 0, %v1081
    %v1083 = vrot.slane %v1078, %v1082
    %v1084 = vadd.f32 %v1073, %v1083
    %1085 = vst [vmem:[#allocation11] sm:$0x1] %v1084
    %1086 = vst [vmem:[#allocation12] sm:$0xff] %v534
    %1087 = vst [vmem:[#allocation12 + $0x8] sm:$0xff] %v535
    %1088 = vst [vmem:[#allocation12 + $0x10] sm:$0xff] %v536
    %1089 = vst [vmem:[#allocation14] sm:$0xff] %v1042
    %1090 = vst [vmem:[#allocation14 + $0x8] sm:$0xff] %v1043
    %1091 = vst [vmem:[#allocation14 + $0x10] sm:$0xff] %v1044
    %1092 = vst [vmem:[#allocation15] sm:$0xff] %v528
    %1093 = vst [vmem:[#allocation15 + $0x8] sm:$0xff] %v529
    %1094 = vst [vmem:[#allocation15 + $0x10] sm:$0xff] %v530
    %1095 = vst [vmem:[#allocation17] sm:$0xff] %v1036
    %1096 = vst [vmem:[#allocation17 + $0x8] sm:$0xff] %v1037
    %1097 = vst [vmem:[#allocation17 + $0x10] sm:$0xff] %v1038
    // Predicated region
    $region66: #{optimizer_forward.1} parent=1 // pred_check
      _
    $region67: #{optimizer_forward.1} parent=1 // pred_check_branch
      %1099 = sbr.rel (0) target = $region69
    $region68: #{optimizer_forward.1} parent=1 // pred_region
      %s1101 = ssub.s32 16, 16
      %1102 = vsyncadd [#allocation5], %s1101
      %s1104 = sshll.u32 [#allocation11], 4
      %s1105 = int_to_ptr.vmem [resolvable:$true] %s1104
      %1107 = dma.vmem_to_hbm [thread:$0]  %s1105, 16, %s12, [#allocation5]
    $region69: #{optimizer_forward.1} parent=1 // pred_fallthru
      _
    // Predicated region
    $region70: #{optimizer_forward.1} parent=1 // pred_check
      _
    $region71: #{optimizer_forward.1} parent=1 // pred_check_branch
      %1109 = sbr.rel (0) target = $region73
    $region72: #{optimizer_forward.1} parent=1 // pred_region
      %s1111 = ssub.s32 384, 384
      %1112 = vsyncadd [#allocation13], %s1111
      %s1113 = sshll.u32 [#allocation12], 4
      %s1114 = int_to_ptr.vmem [resolvable:$true] %s1113
      %1119 = dma.vmem_to_hbm [thread:$0]  %s1114, 384, %s13, [#allocation13], 128, 128, 8
    $region73: #{optimizer_forward.1} parent=1 // pred_fallthru
      _
    // Predicated region
    $region74: #{optimizer_forward.1} parent=1 // pred_check
      _
    $region75: #{optimizer_forward.1} parent=1 // pred_check_branch
      %1121 = sbr.rel (0) target = $region77
    $region76: #{optimizer_forward.1} parent=1 // pred_region
      %s1123 = ssub.s32 384, 384
      %1124 = vsyncadd [#allocation13], %s1123
      %s1125 = sshll.u32 [#allocation14], 4
      %s1126 = int_to_ptr.vmem [resolvable:$true] %s1125
      %1131 = dma.vmem_to_hbm [thread:$0]  %s1126, 384, %s14, [#allocation13], 128, 128, 8
    $region77: #{optimizer_forward.1} parent=1 // pred_fallthru
      _
    // Predicated region
    $region78: #{optimizer_forward.1} parent=1 // pred_check
      _
    $region79: #{optimizer_forward.1} parent=1 // pred_check_branch
      %1133 = sbr.rel (0) target = $region81
    $region80: #{optimizer_forward.1} parent=1 // pred_region
      %s1135 = ssub.s32 384, 384
      %1136 = vsyncadd [#allocation16], %s1135
      %s1137 = sshll.u32 [#allocation15], 4
      %s1138 = int_to_ptr.vmem [resolvable:$true] %s1137
      %1143 = dma.vmem_to_hbm [thread:$0]  %s1138, 384, %s15, [#allocation16], 128, 128, 8
    $region81: #{optimizer_forward.1} parent=1 // pred_fallthru
      _
    // Predicated region
    $region82: #{optimizer_forward.1} parent=1 // pred_check
      _
    $region83: #{optimizer_forward.1} parent=1 // pred_check_branch
      %1145 = sbr.rel (0) target = $region85
    $region84: #{optimizer_forward.1} parent=1 // pred_region
      %s1147 = ssub.s32 384, 384
      %1148 = vsyncadd [#allocation16], %s1147
      %s1149 = sshll.u32 [#allocation17], 4
      %s1150 = int_to_ptr.vmem [resolvable:$true] %s1149
      %1155 = dma.vmem_to_hbm [thread:$0]  %s1150, 384, %s16, [#allocation16], 128, 128, 8
    $region85: #{optimizer_forward.1} parent=1 // pred_fallthru
      _
    // Predicated region
    $region86: #{optimizer_forward.1} parent=1 // pred_check
      _
    $region87: #{optimizer_forward.1} parent=1 // pred_check_branch
      %1157 = sbr.rel (0) target = $region89
    $region88: #{optimizer_forward.1} parent=1 // pred_region
      %1158 = dma.done [#allocation5], 16
    $region89: #{optimizer_forward.1} parent=1 // pred_fallthru
      _
    // Predicated region
    $region90: #{optimizer_forward.1} parent=1 // pred_check
      _
    $region91: #{optimizer_forward.1} parent=1 // pred_check_branch
      %1160 = sbr.rel (0) target = $region93
    $region92: #{optimizer_forward.1} parent=1 // pred_region
      %1161 = dma.done [#allocation13], 384
    $region93: #{optimizer_forward.1} parent=1 // pred_fallthru
      _
    // Predicated region
    $region94: #{optimizer_forward.1} parent=1 // pred_check
      _
    $region95: #{optimizer_forward.1} parent=1 // pred_check_branch
      %1163 = sbr.rel (0) target = $region97
    $region96: #{optimizer_forward.1} parent=1 // pred_region
      %1164 = dma.done [#allocation13], 384
    $region97: #{optimizer_forward.1} parent=1 // pred_fallthru
      _
    // Predicated region
    $region98: #{optimizer_forward.1} parent=1 // pred_check
      _
    $region99: #{optimizer_forward.1} parent=1 // pred_check_branch
      %1166 = sbr.rel (0) target = $region101
    $region100: #{optimizer_forward.1} parent=1 // pred_region
      %1167 = dma.done [#allocation16], 384
    $region101: #{optimizer_forward.1} parent=1 // pred_fallthru
      _
    // Predicated region
    $region102: #{optimizer_forward.1} parent=1 // pred_check
      _
    $region103: #{optimizer_forward.1} parent=1 // pred_check_branch
      %1169 = sbr.rel (0) target = $region105
    $region104: #{optimizer_forward.1} parent=1 // pred_region
      %1170 = dma.done [#allocation16], 384
    $region105: #{optimizer_forward.1} parent=1 // pred_fallthru
      _
    %1171 = vsyncpa [#allocation4], 1
    %1172 = vsyncpa [#allocation7], 1
    %1173 = vsyncpa [#allocation10], 1
    %1174 = vsyncpa [#allocation5], 1
    %1175 = vsyncpa [#allocation13], 1
    %1176 = vsyncpa [#allocation16], 1

</llo_original>
